<compile_context>
chip_gen: v6e
topology: v6e:2x2x1
jax: 0.10.0
libtpu: 0.0.40
codegen_flags: <defaults>
</compile_context>

<pallas_src>
import functools

import jax
import jax.numpy as jnp
from jax.experimental import pallas as pl
from jax.experimental.pallas import tpu as pltpu

EPS = 1e-5

D_IN = 400
D_OUT = 400
HID_PAD = 384      # 264 -> 384 (3 full lane tiles, 24 bf16 sublane rows)
MID = 128
LATENT_PAD = 128   # latent dim zero-padded to one full lane tile
OUT_PAD = 512      # 400 -> 512 so the final store is lane-dense / unmasked

# Packed small-param vector layout: every segment is a multiple of 128 lanes and
# starts at a 128-lane-aligned offset, so the in-kernel static slices are tile-exact.
_PACK_SEGMENTS = (
    ("g1", HID_PAD), ("be1", HID_PAD),
    ("g2", MID), ("be2", MID),
    ("b3", LATENT_PAD),
    ("g3", MID), ("be3", MID),
    ("g4", HID_PAD), ("be4", HID_PAD),
    ("b6", OUT_PAD),
)
_PACK_LAYOUT = {}
_off = 0
for _name, _len in _PACK_SEGMENTS:
    _PACK_LAYOUT[_name] = (_off, _len)
    _off += _len
PACK_TOTAL = _off  # = 2688 lanes, multiple of 128


def _autoencoder_kernel(x_ref, w1_ref, w2_ref, w3_ref, w4_ref, w5_ref, w6_ref,
                        p_ref, out_ref, *, bf16_apply):
    def seg(name):
        off, length = _PACK_LAYOUT[name]
        return p_ref[:, off:off + length]          # [1, F] f32, tile-aligned slice

    def linear(h_bf16, w_ref, bias=None):
        # bf16 x bf16 MXU matmul with f32 accumulation.
        y = jnp.dot(h_bf16, w_ref[...], preferred_element_type=jnp.float32)
        if bias is not None:
            y = y + bias
        return y

    def bn_relu(h_f32, gname, bname):
        # Training-mode BN (batch stats, biased var, eps=1e-5).  Gamma folded into the
        # inv-std ("scale"), mean folded into the shift; one-pass variance in f32.
        # Padded features have gamma=beta=0 (and all-zero h), so they stay exactly 0.
        mean = jnp.mean(h_f32, axis=0, keepdims=True)
        msq = jnp.mean(h_f32 * h_f32, axis=0, keepdims=True)
        var = jnp.maximum(msq - mean * mean, 0.0)
        scale = jax.lax.rsqrt(var + EPS) * seg(gname)     # [1, F] f32
        shift = seg(bname) - mean * scale                 # [1, F] f32
        if bf16_apply:
            # v6e/v7x: bf16-native VALU apply; result feeds the next MXU matmul as-is.
            y = (h_f32.astype(jnp.bfloat16) * scale.astype(jnp.bfloat16)
                 + shift.astype(jnp.bfloat16))
            return jnp.maximum(y, 0.0)                    # stays bf16
        # v5e (no bf16 VPU): apply in f32, single cast for the next matmul.
        y = jnp.maximum(h_f32 * scale + shift, 0.0)
        return y.astype(jnp.bfloat16)

    x = x_ref[...].astype(jnp.bfloat16)

    # ----- encoder -----
    h = bn_relu(linear(x, w1_ref), "g1", "be1")    # [B, 384]; pre-BN bias cancelled
    h = bn_relu(linear(h, w2_ref), "g2", "be2")    # [B, 128]; ReLU(ReLU(.)) == ReLU(.)
    h = linear(h, w3_ref, seg("b3")).astype(jnp.bfloat16)   # [B, 128] latent (padded)
    # ----- decoder -----
    h = bn_relu(linear(h, w4_ref), "g3", "be3")    # [B, 128]; pre-BN bias cancelled
    h = bn_relu(linear(h, w5_ref), "g4", "be4")    # [B, 384]; pre-BN bias cancelled
    out_ref[...] = linear(h, w6_ref, seg("b6"))    # [B, 512] f32, lane-dense store


def _full_spec(shape):
    # Whole-array block resident in VMEM (no grid; BN needs full-batch statistics).
    return pl.BlockSpec(shape, lambda: (0,) * len(shape))


def _bf16_apply_default():
    """bf16 BN/ReLU apply only on chips with bf16-native VALUs (v6e / v7x)."""
    try:
        kind = jax.devices()[0].device_kind.lower()
    except Exception:
        return False
    return ("v6" in kind) or ("v7" in kind)


def autoencoder_forward(x, weights, packed, *, bf16_apply=None, return_padded=False):
    """x: [B, 400] f32; weights: 6 bf16 padded [in,out] matrices;
    packed: [1, PACK_TOTAL] f32.  Returns [B, 400] f32 (or padded [B, 512])."""
    B = x.shape[0]
    if bf16_apply is None:
        bf16_apply = _bf16_apply_default()
    w1, w2, w3, w4, w5, w6 = weights
    args = (x, w1, w2, w3, w4, w5, w6, packed)

    flops = 2 * B * sum(int(w.shape[0]) * int(w.shape[1]) for w in weights)
    bytes_accessed = (
        x.size * x.dtype.itemsize
        + sum(int(w.size) * w.dtype.itemsize for w in weights)
        + packed.size * packed.dtype.itemsize
        + B * OUT_PAD * 4
    )

    # Whole batch resident in VMEM: make the budget explicit and chip-safe.
    param_bytes = sum(int(w.size) * w.dtype.itemsize for w in weights) + PACK_TOTAL * 4
    act_bytes = B * 4 * (D_IN + OUT_PAD + 3 * HID_PAD)   # rough live-activation bound
    vmem_limit = min(100 * 2**20, max(32 * 2**20, int(1.5 * (param_bytes + act_bytes))))
    # TODO(synk): above ~6-12K rows on v7x (64 MiB physical VMEM) switch to a
    # batch-chunked two-pass BN / multi-call path instead of whole-batch residency.

    out_padded = pl.pallas_call(
        functools.partial(_autoencoder_kernel, bf16_apply=bf16_apply),
        out_shape=jax.ShapeDtypeStruct((B, OUT_PAD), jnp.float32),
        in_specs=[_full_spec(a.shape) for a in args],
        out_specs=_full_spec((B, OUT_PAD)),
        compiler_params=pltpu.CompilerParams(vmem_limit_bytes=vmem_limit),
        cost_estimate=pl.CostEstimate(
            flops=flops,
            transcendentals=HID_PAD + MID + MID + HID_PAD,  # one rsqrt per BN feature
            bytes_accessed=bytes_accessed,
        ),
    )(*args)
    if return_padded:
        return out_padded           # avoids the extra XLA slice pass for large B
    return out_padded[:, :D_OUT]


def init_torch_params(key, latent_dim):
    """PyTorch-default init: Linear W,b ~ U(-1/sqrt(fan_in), 1/sqrt(fan_in)),
    BN gamma=1, beta=0.  Weights stored pre-transposed as [in, out], biases [out]."""
    dims = [(D_IN, 264), (264, 128), (128, latent_dim),
            (latent_dim, 128), (128, 264), (264, D_OUT)]
    p = {}
    keys = jax.random.split(key, 2 * len(dims))
    for i, (fin, fout) in enumerate(dims, start=1):
        bound = 1.0 / (fin ** 0.5)
        p[f"w{i}"] = jax.random.uniform(keys[2 * (i - 1)], (fin, fout),
                                        jnp.float32, -bound, bound)
        p[f"b{i}"] = jax.random.uniform(keys[2 * (i - 1) + 1], (fout,),
                                        jnp.float32, -bound, bound)
    for j, f in enumerate((264, 128, 128, 264), start=1):   # BN layers in forward order
        p[f"g{j}"] = jnp.ones((f,), jnp.float32)
        p[f"be{j}"] = jnp.zeros((f,), jnp.float32)
    return p


def pack_params(p, latent_dim):
    """PyTorch-style params -> kernel layout: 6 bf16 zero-padded weight matrices + one
    packed f32 [1, PACK_TOTAL] small-param vector.  Pre-BN biases (b1,b2,b4,b5) are
    dropped: training-mode BatchNorm's mean subtraction cancels them exactly.  All
    padded gamma/beta/weight entries are exactly zero (correctness invariant)."""
    assert latent_dim <= LATENT_PAD
    bf16 = jnp.bfloat16

    def pad_mat(w, rows, cols):
        out = jnp.zeros((rows, cols), w.dtype)
        return out.at[: w.shape[0], : w.shape[1]].set(w)

    weights = (
        pad_mat(p["w1"], D_IN, HID_PAD).astype(bf16),       # [400, 384]
        pad_mat(p["w2"], HID_PAD, MID).astype(bf16),        # [384, 128]
        pad_mat(p["w3"], MID, LATENT_PAD).astype(bf16),     # [128, 128]
        pad_mat(p["w4"], LATENT_PAD, MID).astype(bf16),     # [128, 128]
        pad_mat(p["w5"], MID, HID_PAD).astype(bf16),        # [128, 384]
        pad_mat(p["w6"], HID_PAD, OUT_PAD).astype(bf16),    # [384, 512]
    )

    packed = jnp.zeros((1, PACK_TOTAL), jnp.float32)

    def put(buf, name, vec):
        off, _ = _PACK_LAYOUT[name]
        return buf.at[0, off: off + vec.shape[0]].set(vec)

    for name, val in (("g1", p["g1"]), ("be1", p["be1"]),
                      ("g2", p["g2"]), ("be2", p["be2"]),
                      ("b3", p["b3"]),
                      ("g3", p["g3"]), ("be3", p["be3"]),
                      ("g4", p["g4"]), ("be4", p["be4"]),
                      ("b6", p["b6"])):
        packed = put(packed, name, val)
    return weights, packed


def reference_forward(x, p):
    """Pure-JAX reference mirroring the PyTorch forward (all biases included,
    two-pass biased variance, training-mode BN).  Activations/weights are cast to
    bf16 before each matmul with f32 accumulation so the comparison isolates kernel
    correctness rather than bf16 quantization error."""
    def mm(h, w):
        return jnp.dot(h.astype(jnp.bfloat16), w.astype(jnp.bfloat16),
                       preferred_element_type=jnp.float32)

    def bn(h, g, b):
        m = h.mean(axis=0, keepdims=True)
        v = ((h - m) ** 2).mean(axis=0, keepdims=True)
        return (h - m) * jax.lax.rsqrt(v + EPS) * g + b

    h = mm(x, p["w1"]) + p["b1"]
    h = jnp.maximum(bn(h, p["g1"], p["be1"]), 0.0)
    h = mm(h, p["w2"]) + p["b2"]
    h = jnp.maximum(bn(h, p["g2"], p["be2"]), 0.0)   # ReLU(ReLU(x)) == ReLU(x)
    h = mm(h, p["w3"]) + p["b3"]
    h = mm(h, p["w4"]) + p["b4"]
    h = jnp.maximum(bn(h, p["g3"], p["be3"]), 0.0)
    h = mm(h, p["w5"]) + p["b5"]
    h = jnp.maximum(bn(h, p["g4"], p["be4"]), 0.0)
    h = mm(h, p["w6"]) + p["b6"]
    return h


if __name__ == "__main__":
    latent_dim = 32
    batch = 8   # NOTE: at B=8 the call is fixed-overhead/DMA bound; batch requests
                # (B >= 256 on v6e/v7x) to actually fill the MXU.

    key = jax.random.PRNGKey(0)
    k_x, k_p = jax.random.split(key)
    x = jax.random.normal(k_x, (batch, D_IN), dtype=jnp.float32)

    torch_params = init_torch_params(k_p, latent_dim)
    weights, packed = pack_params(torch_params, latent_dim)

    bf16_apply = _bf16_apply_default()
    out = autoencoder_forward(x, weights, packed, bf16_apply=bf16_apply)
    out = jax.block_until_ready(out)

    ref = reference_forward(x, torch_params)
    assert out.shape == (batch, D_OUT), out.shape
    max_err = float(jnp.max(jnp.abs(out - ref)))
    # bf16 BN-apply (v6e/v7x) adds a little extra quantization noise vs the f32 path.
    tol = 3e-2 if bf16_apply else 1e-2
    assert jnp.allclose(out, ref, atol=tol, rtol=tol), max_err

    print("KERNEL_OK")
</pallas_src>

<mosaic_0001>
module attributes {stable_mosaic.version = 11 : i64} {
  func.func @_autoencoder_kernel(%arg0: memref<8x400xf32, #tpu.memory_space<vmem>>, %arg1: memref<400x384xbf16, #tpu.memory_space<vmem>>, %arg2: memref<384x128xbf16, #tpu.memory_space<vmem>>, %arg3: memref<128x128xbf16, #tpu.memory_space<vmem>>, %arg4: memref<128x128xbf16, #tpu.memory_space<vmem>>, %arg5: memref<128x384xbf16, #tpu.memory_space<vmem>>, %arg6: memref<384x512xbf16, #tpu.memory_space<vmem>>, %arg7: memref<1x2688xf32, #tpu.memory_space<vmem>>, %arg8: memref<8x512xf32, #tpu.memory_space<vmem>>) attributes {dimension_semantics = [], scalar_prefetch = 0 : i64, scratch_operands = 0 : i64, tpu.core_type = #tpu.core_type<tc>} {
    %c0 = arith.constant 0 : index
    %c0_0 = arith.constant 0 : index
    %0 = vector.load %arg0[%c0, %c0_0] : memref<8x400xf32, #tpu.memory_space<vmem>>, vector<8x400xf32>
    %1 = arith.truncf %0 : vector<8x400xf32> to vector<8x400xbf16>
    %c0_1 = arith.constant 0 : index
    %c0_2 = arith.constant 0 : index
    %2 = vector.load %arg1[%c0_1, %c0_2] : memref<400x384xbf16, #tpu.memory_space<vmem>>, vector<400x384xbf16>
    %cst = arith.constant dense<0.000000e+00> : vector<8x384xf32>
    %3 = tpu.matmul %1, %2, %cst {dimension_numbers = #tpu.dot_dimension_numbers<[1], [0], [0], [1], [0, 0, 1, 1], [], []>} : vector<8x400xbf16>, vector<400x384xbf16>, vector<8x384xf32> -> vector<8x384xf32>
    %cst_3 = arith.constant dense<0.000000e+00> : vector<384xf32>
    %4 = vector.multi_reduction <add>, %3, %cst_3 [0] : vector<8x384xf32> to vector<384xf32>
    %5 = vector.shape_cast %4 : vector<384xf32> to vector<1x384xf32>
    %cst_4 = arith.constant 8.000000e+00 : f32
    %6 = vector.broadcast %cst_4 : f32 to vector<1x384xf32>
    %7 = arith.divf %5, %6 : vector<1x384xf32>
    %8 = arith.mulf %3, %3 : vector<8x384xf32>
    %cst_5 = arith.constant dense<0.000000e+00> : vector<384xf32>
    %9 = vector.multi_reduction <add>, %8, %cst_5 [0] : vector<8x384xf32> to vector<384xf32>
    %10 = vector.shape_cast %9 : vector<384xf32> to vector<1x384xf32>
    %cst_6 = arith.constant 8.000000e+00 : f32
    %11 = vector.broadcast %cst_6 : f32 to vector<1x384xf32>
    %12 = arith.divf %10, %11 : vector<1x384xf32>
    %13 = arith.mulf %7, %7 : vector<1x384xf32>
    %14 = arith.subf %12, %13 : vector<1x384xf32>
    %cst_7 = arith.constant 0.000000e+00 : f32
    %15 = vector.broadcast %cst_7 : f32 to vector<1x384xf32>
    %16 = arith.maximumf %14, %15 : vector<1x384xf32>
    %cst_8 = arith.constant 9.99999974E-6 : f32
    %17 = vector.broadcast %cst_8 : f32 to vector<1x384xf32>
    %18 = arith.addf %16, %17 : vector<1x384xf32>
    %19 = math.rsqrt %18 : vector<1x384xf32>
    %c0_9 = arith.constant 0 : index
    %c0_10 = arith.constant 0 : index
    %20 = vector.load %arg7[%c0_9, %c0_10] : memref<1x2688xf32, #tpu.memory_space<vmem>>, vector<1x384xf32>
    %21 = arith.mulf %19, %20 : vector<1x384xf32>
    %c0_11 = arith.constant 0 : index
    %c384 = arith.constant 384 : index
    %22 = vector.load %arg7[%c0_11, %c384] : memref<1x2688xf32, #tpu.memory_space<vmem>>, vector<1x384xf32>
    %23 = arith.mulf %7, %21 : vector<1x384xf32>
    %24 = arith.subf %22, %23 : vector<1x384xf32>
    %25 = vector.broadcast %21 : vector<1x384xf32> to vector<8x384xf32>
    %26 = arith.mulf %3, %25 : vector<8x384xf32>
    %27 = vector.broadcast %24 : vector<1x384xf32> to vector<8x384xf32>
    %28 = arith.addf %26, %27 : vector<8x384xf32>
    %cst_12 = arith.constant 0.000000e+00 : f32
    %29 = vector.broadcast %cst_12 : f32 to vector<8x384xf32>
    %30 = arith.maximumf %28, %29 : vector<8x384xf32>
    %31 = arith.truncf %30 : vector<8x384xf32> to vector<8x384xbf16>
    %c0_13 = arith.constant 0 : index
    %c0_14 = arith.constant 0 : index
    %32 = vector.load %arg2[%c0_13, %c0_14] : memref<384x128xbf16, #tpu.memory_space<vmem>>, vector<384x128xbf16>
    %cst_15 = arith.constant dense<0.000000e+00> : vector<8x128xf32>
    %33 = tpu.matmul %31, %32, %cst_15 {dimension_numbers = #tpu.dot_dimension_numbers<[1], [0], [0], [1], [0, 0, 1, 1], [], []>} : vector<8x384xbf16>, vector<384x128xbf16>, vector<8x128xf32> -> vector<8x128xf32>
    %cst_16 = arith.constant dense<0.000000e+00> : vector<128xf32>
    %34 = vector.multi_reduction <add>, %33, %cst_16 [0] : vector<8x128xf32> to vector<128xf32>
    %35 = vector.shape_cast %34 : vector<128xf32> to vector<1x128xf32>
    %cst_17 = arith.constant 8.000000e+00 : f32
    %36 = vector.broadcast %cst_17 : f32 to vector<1x128xf32>
    %37 = arith.divf %35, %36 : vector<1x128xf32>
    %38 = arith.mulf %33, %33 : vector<8x128xf32>
    %cst_18 = arith.constant dense<0.000000e+00> : vector<128xf32>
    %39 = vector.multi_reduction <add>, %38, %cst_18 [0] : vector<8x128xf32> to vector<128xf32>
    %40 = vector.shape_cast %39 : vector<128xf32> to vector<1x128xf32>
    %cst_19 = arith.constant 8.000000e+00 : f32
    %41 = vector.broadcast %cst_19 : f32 to vector<1x128xf32>
    %42 = arith.divf %40, %41 : vector<1x128xf32>
    %43 = arith.mulf %37, %37 : vector<1x128xf32>
    %44 = arith.subf %42, %43 : vector<1x128xf32>
    %cst_20 = arith.constant 0.000000e+00 : f32
    %45 = vector.broadcast %cst_20 : f32 to vector<1x128xf32>
    %46 = arith.maximumf %44, %45 : vector<1x128xf32>
    %cst_21 = arith.constant 9.99999974E-6 : f32
    %47 = vector.broadcast %cst_21 : f32 to vector<1x128xf32>
    %48 = arith.addf %46, %47 : vector<1x128xf32>
    %49 = math.rsqrt %48 : vector<1x128xf32>
    %c0_22 = arith.constant 0 : index
    %c768 = arith.constant 768 : index
    %50 = vector.load %arg7[%c0_22, %c768] : memref<1x2688xf32, #tpu.memory_space<vmem>>, vector<1x128xf32>
    %51 = arith.mulf %49, %50 : vector<1x128xf32>
    %c0_23 = arith.constant 0 : index
    %c896 = arith.constant 896 : index
    %52 = vector.load %arg7[%c0_23, %c896] : memref<1x2688xf32, #tpu.memory_space<vmem>>, vector<1x128xf32>
    %53 = arith.mulf %37, %51 : vector<1x128xf32>
    %54 = arith.subf %52, %53 : vector<1x128xf32>
    %55 = vector.broadcast %51 : vector<1x128xf32> to vector<8x128xf32>
    %56 = arith.mulf %33, %55 : vector<8x128xf32>
    %57 = vector.broadcast %54 : vector<1x128xf32> to vector<8x128xf32>
    %58 = arith.addf %56, %57 : vector<8x128xf32>
    %cst_24 = arith.constant 0.000000e+00 : f32
    %59 = vector.broadcast %cst_24 : f32 to vector<8x128xf32>
    %60 = arith.maximumf %58, %59 : vector<8x128xf32>
    %61 = arith.truncf %60 : vector<8x128xf32> to vector<8x128xbf16>
    %c0_25 = arith.constant 0 : index
    %c1024 = arith.constant 1024 : index
    %62 = vector.load %arg7[%c0_25, %c1024] : memref<1x2688xf32, #tpu.memory_space<vmem>>, vector<1x128xf32>
    %c0_26 = arith.constant 0 : index
    %c0_27 = arith.constant 0 : index
    %63 = vector.load %arg3[%c0_26, %c0_27] : memref<128x128xbf16, #tpu.memory_space<vmem>>, vector<128x128xbf16>
    %cst_28 = arith.constant dense<0.000000e+00> : vector<8x128xf32>
    %64 = tpu.matmul %61, %63, %cst_28 {dimension_numbers = #tpu.dot_dimension_numbers<[1], [0], [0], [1], [0, 0, 1, 1], [], []>} : vector<8x128xbf16>, vector<128x128xbf16>, vector<8x128xf32> -> vector<8x128xf32>
    %65 = vector.broadcast %62 : vector<1x128xf32> to vector<8x128xf32>
    %66 = arith.addf %64, %65 : vector<8x128xf32>
    %67 = arith.truncf %66 : vector<8x128xf32> to vector<8x128xbf16>
    %c0_29 = arith.constant 0 : index
    %c0_30 = arith.constant 0 : index
    %68 = vector.load %arg4[%c0_29, %c0_30] : memref<128x128xbf16, #tpu.memory_space<vmem>>, vector<128x128xbf16>
    %cst_31 = arith.constant dense<0.000000e+00> : vector<8x128xf32>
    %69 = tpu.matmul %67, %68, %cst_31 {dimension_numbers = #tpu.dot_dimension_numbers<[1], [0], [0], [1], [0, 0, 1, 1], [], []>} : vector<8x128xbf16>, vector<128x128xbf16>, vector<8x128xf32> -> vector<8x128xf32>
    %cst_32 = arith.constant dense<0.000000e+00> : vector<128xf32>
    %70 = vector.multi_reduction <add>, %69, %cst_32 [0] : vector<8x128xf32> to vector<128xf32>
    %71 = vector.shape_cast %70 : vector<128xf32> to vector<1x128xf32>
    %cst_33 = arith.constant 8.000000e+00 : f32
    %72 = vector.broadcast %cst_33 : f32 to vector<1x128xf32>
    %73 = arith.divf %71, %72 : vector<1x128xf32>
    %74 = arith.mulf %69, %69 : vector<8x128xf32>
    %cst_34 = arith.constant dense<0.000000e+00> : vector<128xf32>
    %75 = vector.multi_reduction <add>, %74, %cst_34 [0] : vector<8x128xf32> to vector<128xf32>
    %76 = vector.shape_cast %75 : vector<128xf32> to vector<1x128xf32>
    %cst_35 = arith.constant 8.000000e+00 : f32
    %77 = vector.broadcast %cst_35 : f32 to vector<1x128xf32>
    %78 = arith.divf %76, %77 : vector<1x128xf32>
    %79 = arith.mulf %73, %73 : vector<1x128xf32>
    %80 = arith.subf %78, %79 : vector<1x128xf32>
    %cst_36 = arith.constant 0.000000e+00 : f32
    %81 = vector.broadcast %cst_36 : f32 to vector<1x128xf32>
    %82 = arith.maximumf %80, %81 : vector<1x128xf32>
    %cst_37 = arith.constant 9.99999974E-6 : f32
    %83 = vector.broadcast %cst_37 : f32 to vector<1x128xf32>
    %84 = arith.addf %82, %83 : vector<1x128xf32>
    %85 = math.rsqrt %84 : vector<1x128xf32>
    %c0_38 = arith.constant 0 : index
    %c1152 = arith.constant 1152 : index
    %86 = vector.load %arg7[%c0_38, %c1152] : memref<1x2688xf32, #tpu.memory_space<vmem>>, vector<1x128xf32>
    %87 = arith.mulf %85, %86 : vector<1x128xf32>
    %c0_39 = arith.constant 0 : index
    %c1280 = arith.constant 1280 : index
    %88 = vector.load %arg7[%c0_39, %c1280] : memref<1x2688xf32, #tpu.memory_space<vmem>>, vector<1x128xf32>
    %89 = arith.mulf %73, %87 : vector<1x128xf32>
    %90 = arith.subf %88, %89 : vector<1x128xf32>
    %91 = vector.broadcast %87 : vector<1x128xf32> to vector<8x128xf32>
    %92 = arith.mulf %69, %91 : vector<8x128xf32>
    %93 = vector.broadcast %90 : vector<1x128xf32> to vector<8x128xf32>
    %94 = arith.addf %92, %93 : vector<8x128xf32>
    %cst_40 = arith.constant 0.000000e+00 : f32
    %95 = vector.broadcast %cst_40 : f32 to vector<8x128xf32>
    %96 = arith.maximumf %94, %95 : vector<8x128xf32>
    %97 = arith.truncf %96 : vector<8x128xf32> to vector<8x128xbf16>
    %c0_41 = arith.constant 0 : index
    %c0_42 = arith.constant 0 : index
    %98 = vector.load %arg5[%c0_41, %c0_42] : memref<128x384xbf16, #tpu.memory_space<vmem>>, vector<128x384xbf16>
    %cst_43 = arith.constant dense<0.000000e+00> : vector<8x384xf32>
    %99 = tpu.matmul %97, %98, %cst_43 {dimension_numbers = #tpu.dot_dimension_numbers<[1], [0], [0], [1], [0, 0, 1, 1], [], []>} : vector<8x128xbf16>, vector<128x384xbf16>, vector<8x384xf32> -> vector<8x384xf32>
    %cst_44 = arith.constant dense<0.000000e+00> : vector<384xf32>
    %100 = vector.multi_reduction <add>, %99, %cst_44 [0] : vector<8x384xf32> to vector<384xf32>
    %101 = vector.shape_cast %100 : vector<384xf32> to vector<1x384xf32>
    %cst_45 = arith.constant 8.000000e+00 : f32
    %102 = vector.broadcast %cst_45 : f32 to vector<1x384xf32>
    %103 = arith.divf %101, %102 : vector<1x384xf32>
    %104 = arith.mulf %99, %99 : vector<8x384xf32>
    %cst_46 = arith.constant dense<0.000000e+00> : vector<384xf32>
    %105 = vector.multi_reduction <add>, %104, %cst_46 [0] : vector<8x384xf32> to vector<384xf32>
    %106 = vector.shape_cast %105 : vector<384xf32> to vector<1x384xf32>
    %cst_47 = arith.constant 8.000000e+00 : f32
    %107 = vector.broadcast %cst_47 : f32 to vector<1x384xf32>
    %108 = arith.divf %106, %107 : vector<1x384xf32>
    %109 = arith.mulf %103, %103 : vector<1x384xf32>
    %110 = arith.subf %108, %109 : vector<1x384xf32>
    %cst_48 = arith.constant 0.000000e+00 : f32
    %111 = vector.broadcast %cst_48 : f32 to vector<1x384xf32>
    %112 = arith.maximumf %110, %111 : vector<1x384xf32>
    %cst_49 = arith.constant 9.99999974E-6 : f32
    %113 = vector.broadcast %cst_49 : f32 to vector<1x384xf32>
    %114 = arith.addf %112, %113 : vector<1x384xf32>
    %115 = math.rsqrt %114 : vector<1x384xf32>
    %c0_50 = arith.constant 0 : index
    %c1408 = arith.constant 1408 : index
    %116 = vector.load %arg7[%c0_50, %c1408] : memref<1x2688xf32, #tpu.memory_space<vmem>>, vector<1x384xf32>
    %117 = arith.mulf %115, %116 : vector<1x384xf32>
    %c0_51 = arith.constant 0 : index
    %c1792 = arith.constant 1792 : index
    %118 = vector.load %arg7[%c0_51, %c1792] : memref<1x2688xf32, #tpu.memory_space<vmem>>, vector<1x384xf32>
    %119 = arith.mulf %103, %117 : vector<1x384xf32>
    %120 = arith.subf %118, %119 : vector<1x384xf32>
    %121 = vector.broadcast %117 : vector<1x384xf32> to vector<8x384xf32>
    %122 = arith.mulf %99, %121 : vector<8x384xf32>
    %123 = vector.broadcast %120 : vector<1x384xf32> to vector<8x384xf32>
    %124 = arith.addf %122, %123 : vector<8x384xf32>
    %cst_52 = arith.constant 0.000000e+00 : f32
    %125 = vector.broadcast %cst_52 : f32 to vector<8x384xf32>
    %126 = arith.maximumf %124, %125 : vector<8x384xf32>
    %127 = arith.truncf %126 : vector<8x384xf32> to vector<8x384xbf16>
    %c0_53 = arith.constant 0 : index
    %c2176 = arith.constant 2176 : index
    %128 = vector.load %arg7[%c0_53, %c2176] : memref<1x2688xf32, #tpu.memory_space<vmem>>, vector<1x512xf32>
    %c0_54 = arith.constant 0 : index
    %c0_55 = arith.constant 0 : index
    %129 = vector.load %arg6[%c0_54, %c0_55] : memref<384x512xbf16, #tpu.memory_space<vmem>>, vector<384x512xbf16>
    %cst_56 = arith.constant dense<0.000000e+00> : vector<8x512xf32>
    %130 = tpu.matmul %127, %129, %cst_56 {dimension_numbers = #tpu.dot_dimension_numbers<[1], [0], [0], [1], [0, 0, 1, 1], [], []>} : vector<8x384xbf16>, vector<384x512xbf16>, vector<8x512xf32> -> vector<8x512xf32>
    %131 = vector.broadcast %128 : vector<1x512xf32> to vector<8x512xf32>
    %132 = arith.addf %130, %131 : vector<8x512xf32>
    %c0_57 = arith.constant 0 : index
    %c0_58 = arith.constant 0 : index
    %133 = vector.load %arg8[%c0_57, %c0_58] : memref<8x512xf32, #tpu.memory_space<vmem>>, vector<8x512xf32>
    tpu.vector_store %arg8[%c0_57, %c0_58], %132 {strides = array<i32>} : memref<8x512xf32, #tpu.memory_space<vmem>>, vector<8x512xf32>,
    return
  }
}

</mosaic_0001>

<llo_original>
// kernel: tpu_custom_call.1
$region0: #{tpu_custom_call.1}
  #allocation0 [shape = 'u32[]', space=smem, size = 0x4, offset = 0x4, fixed_abs, tag = 'smem constant byte address 0x4 - core index']
  #allocation1 [shape = 'u32[144,128]{1,0:T(1,128)}', space=vmem, size = 0x12000, scoped, tag = 'internal scratch']
  %s0 = inlined_call_operand.hbm [shape: f32[8,400], index: 0, kind: input, shape index: {}]
  %s1 = inlined_call_operand.hbm [shape: bf16[400,384], index: 1, kind: input, shape index: {}]
  %s2 = inlined_call_operand.hbm [shape: bf16[384,128], index: 2, kind: input, shape index: {}]
  %s3 = inlined_call_operand.hbm [shape: bf16[128,128], index: 3, kind: input, shape index: {}]
  %s4 = inlined_call_operand.hbm [shape: bf16[128,128], index: 4, kind: input, shape index: {}]
  %s5 = inlined_call_operand.hbm [shape: bf16[128,384], index: 5, kind: input, shape index: {}]
  %s6 = inlined_call_operand.hbm [shape: bf16[384,512], index: 6, kind: input, shape index: {}]
  %s7 = inlined_call_operand.hbm [shape: f32[1,2688], index: 7, kind: input, shape index: {}]
  %s8 = inlined_call_operand.hbm [shape: f32[8,512], index: 8, kind: output, shape index: {}]
  %s9 = sld [smem:[#allocation0]]
  $region74: #{tpu_custom_call.1} parent=0
    _
  %s11 = ssub.s32 1, %s9
  %s12 = scalar_select 0, %s11, %s9
  $region1: #{tpu_custom_call.1} parent=0
    #allocation2 [shape = 'u8[16384]{0}', space=vmem, size = 0x4000, scoped, tag = 'input window, operand 0, single buffered']
    #allocation3 [shape = 's32[1]{0}', space=sflag, size = 0x4, scoped, tag = 'scoped memory for tpu_custom_call.1']
    #allocation4 [shape = 's32[1]{0}', space=sflag, size = 0x4, scoped, tag = 'scoped memory for tpu_custom_call.1']
    #allocation5 [shape = 'u8[307200]{0}', space=vmem, size = 0x4b000, scoped, tag = 'input window, operand 1, single buffered']
    #allocation6 [shape = 's32[1]{0}', space=sflag, size = 0x4, scoped, tag = 'scoped memory for tpu_custom_call.1']
    #allocation7 [shape = 'u8[98304]{0}', space=vmem, size = 0x18000, scoped, tag = 'input window, operand 2, single buffered']
    #allocation8 [shape = 'u8[32768]{0}', space=vmem, size = 0x8000, scoped, tag = 'input window, operand 3, single buffered']
    #allocation9 [shape = 's32[1]{0}', space=sflag, size = 0x4, scoped, tag = 'scoped memory for tpu_custom_call.1']
    #allocation10 [shape = 'u8[32768]{0}', space=vmem, size = 0x8000, scoped, tag = 'input window, operand 4, single buffered']
    #allocation11 [shape = 'u8[98304]{0}', space=vmem, size = 0x18000, scoped, tag = 'input window, operand 5, single buffered']
    #allocation12 [shape = 's32[1]{0}', space=sflag, size = 0x4, scoped, tag = 'scoped memory for tpu_custom_call.1']
    #allocation13 [shape = 'u8[393216]{0}', space=vmem, size = 0x60000, scoped, tag = 'input window, operand 6, single buffered']
    #allocation14 [shape = 'u8[10752]{0}', space=vmem, size = 0x2c00, scoped, tag = 'input window, operand 7, single buffered']
    #allocation15 [shape = 's32[1]{0}', space=sflag, size = 0x4, scoped, tag = 'scoped memory for tpu_custom_call.1']
    #allocation16 [shape = 'u8[16384]{0}', space=vmem, size = 0x4000, scoped, tag = 'output window, operand 0, single buffered']
    %13 = vsyncpa [#allocation3], 0
    %14 = vsyncpa [#allocation6], 0
    %15 = vsyncpa [#allocation9], 0
    %16 = vsyncpa [#allocation12], 0
    %17 = vsyncpa [#allocation15], 0
    %18 = vsyncpa [#allocation4], 0
    // Predicated region
    $region2: #{tpu_custom_call.1} parent=1 // pred_check
      _
    $region3: #{tpu_custom_call.1} parent=1 // pred_check_branch
      %20 = sbr.rel (0) target = $region5
    $region4: #{tpu_custom_call.1} parent=1 // pred_region
      %s22 = ssub.s32 512, 512
      %23 = vsyncadd [#allocation3], %s22
      %s25 = sshll.u32 [#allocation2], 4
      %s26 = int_to_ptr.vmem [resolvable:$true] %s25
      %28 = dma.hbm_to_vmem [thread:$0]  %s0, 512, %s26, [#allocation3]
    $region5: #{tpu_custom_call.1} parent=1 // pred_fallthru
      _
    // Predicated region
    $region6: #{tpu_custom_call.1} parent=1 // pred_check
      _
    $region7: #{tpu_custom_call.1} parent=1 // pred_check_branch
      %30 = sbr.rel (0) target = $region9
    $region8: #{tpu_custom_call.1} parent=1 // pred_region
      %s32 = ssub.s32 9600, 9600
      %33 = vsyncadd [#allocation6], %s32
      %s34 = sshll.u32 [#allocation5], 4
      %s35 = int_to_ptr.vmem [resolvable:$true] %s34
      %40 = dma.hbm_to_vmem [thread:$0]  %s1, 9600, %s35, [#allocation6], 192, 192, 12
    $region9: #{tpu_custom_call.1} parent=1 // pred_fallthru
      _
    // Predicated region
    $region10: #{tpu_custom_call.1} parent=1 // pred_check
      _
    $region11: #{tpu_custom_call.1} parent=1 // pred_check_branch
      %42 = sbr.rel (0) target = $region13
    $region12: #{tpu_custom_call.1} parent=1 // pred_region
      %s44 = ssub.s32 3072, 3072
      %45 = vsyncadd [#allocation6], %s44
      %s46 = sshll.u32 [#allocation7], 4
      %s47 = int_to_ptr.vmem [resolvable:$true] %s46
      %52 = dma.hbm_to_vmem [thread:$0]  %s2, 3072, %s47, [#allocation6], 64, 64, 4
    $region13: #{tpu_custom_call.1} parent=1 // pred_fallthru
      _
    // Predicated region
    $region14: #{tpu_custom_call.1} parent=1 // pred_check
      _
    $region15: #{tpu_custom_call.1} parent=1 // pred_check_branch
      %54 = sbr.rel (0) target = $region17
    $region16: #{tpu_custom_call.1} parent=1 // pred_region
      %s56 = ssub.s32 1024, 1024
      %57 = vsyncadd [#allocation9], %s56
      %s58 = sshll.u32 [#allocation8], 4
      %s59 = int_to_ptr.vmem [resolvable:$true] %s58
      %64 = dma.hbm_to_vmem [thread:$0]  %s3, 1024, %s59, [#allocation9], 64, 64, 4
    $region17: #{tpu_custom_call.1} parent=1 // pred_fallthru
      _
    // Predicated region
    $region18: #{tpu_custom_call.1} parent=1 // pred_check
      _
    $region19: #{tpu_custom_call.1} parent=1 // pred_check_branch
      %66 = sbr.rel (0) target = $region21
    $region20: #{tpu_custom_call.1} parent=1 // pred_region
      %s68 = ssub.s32 1024, 1024
      %69 = vsyncadd [#allocation9], %s68
      %s70 = sshll.u32 [#allocation10], 4
      %s71 = int_to_ptr.vmem [resolvable:$true] %s70
      %76 = dma.hbm_to_vmem [thread:$0]  %s4, 1024, %s71, [#allocation9], 64, 64, 4
    $region21: #{tpu_custom_call.1} parent=1 // pred_fallthru
      _
    // Predicated region
    $region22: #{tpu_custom_call.1} parent=1 // pred_check
      _
    $region23: #{tpu_custom_call.1} parent=1 // pred_check_branch
      %78 = sbr.rel (0) target = $region25
    $region24: #{tpu_custom_call.1} parent=1 // pred_region
      %s80 = ssub.s32 3072, 3072
      %81 = vsyncadd [#allocation12], %s80
      %s82 = sshll.u32 [#allocation11], 4
      %s83 = int_to_ptr.vmem [resolvable:$true] %s82
      %88 = dma.hbm_to_vmem [thread:$0]  %s5, 3072, %s83, [#allocation12], 192, 192, 12
    $region25: #{tpu_custom_call.1} parent=1 // pred_fallthru
      _
    // Predicated region
    $region26: #{tpu_custom_call.1} parent=1 // pred_check
      _
    $region27: #{tpu_custom_call.1} parent=1 // pred_check_branch
      %90 = sbr.rel (0) target = $region29
    $region28: #{tpu_custom_call.1} parent=1 // pred_region
      %s92 = ssub.s32 12288, 12288
      %93 = vsyncadd [#allocation12], %s92
      %s94 = sshll.u32 [#allocation13], 4
      %s95 = int_to_ptr.vmem [resolvable:$true] %s94
      %100 = dma.hbm_to_vmem [thread:$0]  %s6, 12288, %s95, [#allocation12], 256, 256, 16
    $region29: #{tpu_custom_call.1} parent=1 // pred_fallthru
      _
    // Predicated region
    $region30: #{tpu_custom_call.1} parent=1 // pred_check
      _
    $region31: #{tpu_custom_call.1} parent=1 // pred_check_branch
      %102 = sbr.rel (0) target = $region33
    $region32: #{tpu_custom_call.1} parent=1 // pred_region
      %s104 = ssub.s32 336, 336
      %105 = vsyncadd [#allocation15], %s104
      %s107 = sshll.u32 [#allocation14], 4
      %s108 = int_to_ptr.vmem [resolvable:$true] %s107
      %110 = dma.hbm_to_vmem [thread:$0]  %s7, 336, %s108, [#allocation15]
    $region33: #{tpu_custom_call.1} parent=1 // pred_fallthru
      _
    // Predicated region
    $region34: #{tpu_custom_call.1} parent=1 // pred_check
      _
    $region35: #{tpu_custom_call.1} parent=1 // pred_check_branch
      %112 = sbr.rel (0) target = $region37
    $region36: #{tpu_custom_call.1} parent=1 // pred_region
      %113 = dma.done [#allocation3], 512
    $region37: #{tpu_custom_call.1} parent=1 // pred_fallthru
      _
    // Predicated region
    $region38: #{tpu_custom_call.1} parent=1 // pred_check
      _
    $region39: #{tpu_custom_call.1} parent=1 // pred_check_branch
      %115 = sbr.rel (0) target = $region41
    $region40: #{tpu_custom_call.1} parent=1 // pred_region
      %116 = dma.done [#allocation6], 9600
    $region41: #{tpu_custom_call.1} parent=1 // pred_fallthru
      _
    // Predicated region
    $region42: #{tpu_custom_call.1} parent=1 // pred_check
      _
    $region43: #{tpu_custom_call.1} parent=1 // pred_check_branch
      %118 = sbr.rel (0) target = $region45
    $region44: #{tpu_custom_call.1} parent=1 // pred_region
      %119 = dma.done [#allocation6], 3072
    $region45: #{tpu_custom_call.1} parent=1 // pred_fallthru
      _
    // Predicated region
    $region46: #{tpu_custom_call.1} parent=1 // pred_check
      _
    $region47: #{tpu_custom_call.1} parent=1 // pred_check_branch
      %121 = sbr.rel (0) target = $region49
    $region48: #{tpu_custom_call.1} parent=1 // pred_region
      %122 = dma.done [#allocation9], 1024
    $region49: #{tpu_custom_call.1} parent=1 // pred_fallthru
      _
    // Predicated region
    $region50: #{tpu_custom_call.1} parent=1 // pred_check
      _
    $region51: #{tpu_custom_call.1} parent=1 // pred_check_branch
      %124 = sbr.rel (0) target = $region53
    $region52: #{tpu_custom_call.1} parent=1 // pred_region
      %125 = dma.done [#allocation9], 1024
    $region53: #{tpu_custom_call.1} parent=1 // pred_fallthru
      _
    // Predicated region
    $region54: #{tpu_custom_call.1} parent=1 // pred_check
      _
    $region55: #{tpu_custom_call.1} parent=1 // pred_check_branch
      %127 = sbr.rel (0) target = $region57
    $region56: #{tpu_custom_call.1} parent=1 // pred_region
      %128 = dma.done [#allocation12], 3072
    $region57: #{tpu_custom_call.1} parent=1 // pred_fallthru
      _
    // Predicated region
    $region58: #{tpu_custom_call.1} parent=1 // pred_check
      _
    $region59: #{tpu_custom_call.1} parent=1 // pred_check_branch
      %130 = sbr.rel (0) target = $region61
    $region60: #{tpu_custom_call.1} parent=1 // pred_region
      %131 = dma.done [#allocation12], 12288
    $region61: #{tpu_custom_call.1} parent=1 // pred_fallthru
      _
    // Predicated region
    $region62: #{tpu_custom_call.1} parent=1 // pred_check
      _
    $region63: #{tpu_custom_call.1} parent=1 // pred_check_branch
      %133 = sbr.rel (0) target = $region65
    $region64: #{tpu_custom_call.1} parent=1 // pred_region
      %134 = dma.done [#allocation15], 336
    $region65: #{tpu_custom_call.1} parent=1 // pred_fallthru
      _
    %v136 = vld [vmem:[#allocation2] sm:$0xff]
    %v137 = vld [vmem:[#allocation2 + $0x8] sm:$0xff]
    %v138 = vld [vmem:[#allocation2 + $0x10] sm:$0xff]
    %v139 = vld [vmem:[#allocation2 + $0x18] sm:$0xff]
    %v140 = vpack.c.bf16 %v136, %v136
    %v141 = vpack.c.bf16 %v137, %v137
    %v142 = vpack.c.bf16 %v138, %v138
    %v143 = vpack.c.bf16 %v139, %v139
    %v144 = vld [vmem:[#allocation5] sm:$0xff]
    %v145 = vld [vmem:[#allocation5 + $0x8] sm:$0xf]
    %v146 = vld [vmem:[#allocation5 + $0xc] sm:$0xff]
    %v147 = vld [vmem:[#allocation5 + $0x14] sm:$0xf]
    %v148 = vld [vmem:[#allocation5 + $0x18] sm:$0xff]
    %v149 = vld [vmem:[#allocation5 + $0x20] sm:$0xf]
    %v150 = vld [vmem:[#allocation5 + $0x24] sm:$0xff]
    %v151 = vld [vmem:[#allocation5 + $0x2c] sm:$0xf]
    %v152 = vld [vmem:[#allocation5 + $0x30] sm:$0xff]
    %v153 = vld [vmem:[#allocation5 + $0x38] sm:$0xf]
    %v154 = vld [vmem:[#allocation5 + $0x3c] sm:$0xff]
    %v155 = vld [vmem:[#allocation5 + $0x44] sm:$0xf]
    %v156 = vld [vmem:[#allocation5 + $0x48] sm:$0xff]
    %v157 = vld [vmem:[#allocation5 + $0x50] sm:$0xf]
    %v158 = vld [vmem:[#allocation5 + $0x54] sm:$0xff]
    %v159 = vld [vmem:[#allocation5 + $0x5c] sm:$0xf]
    %v160 = vld [vmem:[#allocation5 + $0x60] sm:$0xff]
    %v161 = vld [vmem:[#allocation5 + $0x68] sm:$0xf]
    %v162 = vld [vmem:[#allocation5 + $0x6c] sm:$0xff]
    %v163 = vld [vmem:[#allocation5 + $0x74] sm:$0xf]
    %v164 = vld [vmem:[#allocation5 + $0x78] sm:$0xff]
    %v165 = vld [vmem:[#allocation5 + $0x80] sm:$0xf]
    %v166 = vld [vmem:[#allocation5 + $0x84] sm:$0xff]
    %v167 = vld [vmem:[#allocation5 + $0x8c] sm:$0xf]
    %v168 = vld [vmem:[#allocation5 + $0x90] sm:$0xff]
    %v169 = vld [vmem:[#allocation5 + $0x98] sm:$0xf]
    %v170 = vld [vmem:[#allocation5 + $0x9c] sm:$0xff]
    %v171 = vld [vmem:[#allocation5 + $0xa4] sm:$0xf]
    %v172 = vld [vmem:[#allocation5 + $0xa8] sm:$0xff]
    %v173 = vld [vmem:[#allocation5 + $0xb0] sm:$0xf]
    %v174 = vld [vmem:[#allocation5 + $0xb4] sm:$0xff]
    %v175 = vld [vmem:[#allocation5 + $0xbc] sm:$0xf]
    %v176 = vld [vmem:[#allocation5 + $0xc0] sm:$0xff]
    %v177 = vld [vmem:[#allocation5 + $0xc8] sm:$0xf]
    %v178 = vld [vmem:[#allocation5 + $0xcc] sm:$0xff]
    %v179 = vld [vmem:[#allocation5 + $0xd4] sm:$0xf]
    %v180 = vld [vmem:[#allocation5 + $0xd8] sm:$0xff]
    %v181 = vld [vmem:[#allocation5 + $0xe0] sm:$0xf]
    %v182 = vld [vmem:[#allocation5 + $0xe4] sm:$0xff]
    %v183 = vld [vmem:[#allocation5 + $0xec] sm:$0xf]
    %v184 = vld [vmem:[#allocation5 + $0xf0] sm:$0xff]
    %v185 = vld [vmem:[#allocation5 + $0xf8] sm:$0xf]
    %v186 = vld [vmem:[#allocation5 + $0xfc] sm:$0xff]
    %v187 = vld [vmem:[#allocation5 + $0x104] sm:$0xf]
    %v188 = vld [vmem:[#allocation5 + $0x108] sm:$0xff]
    %v189 = vld [vmem:[#allocation5 + $0x110] sm:$0xf]
    %v190 = vld [vmem:[#allocation5 + $0x114] sm:$0xff]
    %v191 = vld [vmem:[#allocation5 + $0x11c] sm:$0xf]
    %v192 = vld [vmem:[#allocation5 + $0x120] sm:$0xff]
    %v193 = vld [vmem:[#allocation5 + $0x128] sm:$0xf]
    %v194 = vld [vmem:[#allocation5 + $0x12c] sm:$0xff]
    %v195 = vld [vmem:[#allocation5 + $0x134] sm:$0xf]
    %v196 = vld [vmem:[#allocation5 + $0x138] sm:$0xff]
    %v197 = vld [vmem:[#allocation5 + $0x140] sm:$0xf]
    %v198 = vld [vmem:[#allocation5 + $0x144] sm:$0xff]
    %v199 = vld [vmem:[#allocation5 + $0x14c] sm:$0xf]
    %v200 = vld [vmem:[#allocation5 + $0x150] sm:$0xff]
    %v201 = vld [vmem:[#allocation5 + $0x158] sm:$0xf]
    %v202 = vld [vmem:[#allocation5 + $0x15c] sm:$0xff]
    %v203 = vld [vmem:[#allocation5 + $0x164] sm:$0xf]
    %v204 = vld [vmem:[#allocation5 + $0x168] sm:$0xff]
    %v205 = vld [vmem:[#allocation5 + $0x170] sm:$0xf]
    %v206 = vld [vmem:[#allocation5 + $0x174] sm:$0xff]
    %v207 = vld [vmem:[#allocation5 + $0x17c] sm:$0xf]
    %v208 = vld [vmem:[#allocation5 + $0x180] sm:$0xff]
    %v209 = vld [vmem:[#allocation5 + $0x188] sm:$0xf]
    %v210 = vld [vmem:[#allocation5 + $0x18c] sm:$0xff]
    %v211 = vld [vmem:[#allocation5 + $0x194] sm:$0xf]
    %v212 = vld [vmem:[#allocation5 + $0x198] sm:$0xff]
    %v213 = vld [vmem:[#allocation5 + $0x1a0] sm:$0xf]
    %v214 = vld [vmem:[#allocation5 + $0x1a4] sm:$0xff]
    %v215 = vld [vmem:[#allocation5 + $0x1ac] sm:$0xf]
    %v216 = vld [vmem:[#allocation5 + $0x1b0] sm:$0xff]
    %v217 = vld [vmem:[#allocation5 + $0x1b8] sm:$0xf]
    %v218 = vld [vmem:[#allocation5 + $0x1bc] sm:$0xff]
    %v219 = vld [vmem:[#allocation5 + $0x1c4] sm:$0xf]
    %v220 = vld [vmem:[#allocation5 + $0x1c8] sm:$0xff]
    %v221 = vld [vmem:[#allocation5 + $0x1d0] sm:$0xf]
    %v222 = vld [vmem:[#allocation5 + $0x1d4] sm:$0xff]
    %v223 = vld [vmem:[#allocation5 + $0x1dc] sm:$0xf]
    %v224 = vld [vmem:[#allocation5 + $0x1e0] sm:$0xff]
    %v225 = vld [vmem:[#allocation5 + $0x1e8] sm:$0xf]
    %v226 = vld [vmem:[#allocation5 + $0x1ec] sm:$0xff]
    %v227 = vld [vmem:[#allocation5 + $0x1f4] sm:$0xf]
    %v228 = vld [vmem:[#allocation5 + $0x1f8] sm:$0xff]
    %v229 = vld [vmem:[#allocation5 + $0x200] sm:$0xf]
    %v230 = vld [vmem:[#allocation5 + $0x204] sm:$0xff]
    %v231 = vld [vmem:[#allocation5 + $0x20c] sm:$0xf]
    %v232 = vld [vmem:[#allocation5 + $0x210] sm:$0xff]
    %v233 = vld [vmem:[#allocation5 + $0x218] sm:$0xf]
    %v234 = vld [vmem:[#allocation5 + $0x21c] sm:$0xff]
    %v235 = vld [vmem:[#allocation5 + $0x224] sm:$0xf]
    %v236 = vld [vmem:[#allocation5 + $0x228] sm:$0xff]
    %v237 = vld [vmem:[#allocation5 + $0x230] sm:$0xf]
    %v238 = vld [vmem:[#allocation5 + $0x234] sm:$0xff]
    %v239 = vld [vmem:[#allocation5 + $0x23c] sm:$0xf]
    %v240 = vld [vmem:[#allocation5 + $0x240] sm:$0xff]
    %v241 = vld [vmem:[#allocation5 + $0x248] sm:$0xf]
    %v242 = vld [vmem:[#allocation5 + $0x24c] sm:$0xff]
    %v243 = vld [vmem:[#allocation5 + $0x254] sm:$0xf]
    %v344 = vunpack.c.l.b16 %v144
    %v345 = vunpack.c.h.b16 %v144
    %v346 = vunpack.c.l.b16 %v145
    %v347 = vunpack.c.l.b16 %v146
    %v348 = vunpack.c.h.b16 %v146
    %v349 = vunpack.c.l.b16 %v147
    %v350 = vunpack.c.l.b16 %v148
    %v351 = vunpack.c.h.b16 %v148
    %v352 = vunpack.c.l.b16 %v149
    %v353 = vunpack.c.l.b16 %v150
    %v354 = vunpack.c.h.b16 %v150
    %v355 = vunpack.c.l.b16 %v151
    %v356 = vunpack.c.l.b16 %v152
    %v357 = vunpack.c.h.b16 %v152
    %v358 = vunpack.c.l.b16 %v153
    %v359 = vunpack.c.l.b16 %v154
    %v360 = vunpack.c.h.b16 %v154
    %v361 = vunpack.c.l.b16 %v155
    %v362 = vunpack.c.l.b16 %v156
    %v363 = vunpack.c.h.b16 %v156
    %v364 = vunpack.c.l.b16 %v157
    %v365 = vunpack.c.l.b16 %v158
    %v366 = vunpack.c.h.b16 %v158
    %v367 = vunpack.c.l.b16 %v159
    %v368 = vunpack.c.l.b16 %v160
    %v369 = vunpack.c.h.b16 %v160
    %v370 = vunpack.c.l.b16 %v161
    %v371 = vunpack.c.l.b16 %v162
    %v372 = vunpack.c.h.b16 %v162
    %v373 = vunpack.c.l.b16 %v163
    %v374 = vunpack.c.l.b16 %v164
    %v375 = vunpack.c.h.b16 %v164
    %v376 = vunpack.c.l.b16 %v165
    %v377 = vunpack.c.l.b16 %v166
    %v378 = vunpack.c.h.b16 %v166
    %v379 = vunpack.c.l.b16 %v167
    %v380 = vunpack.c.l.b16 %v168
    %v381 = vunpack.c.h.b16 %v168
    %v382 = vunpack.c.l.b16 %v169
    %v383 = vunpack.c.l.b16 %v170
    %v384 = vunpack.c.h.b16 %v170
    %v385 = vunpack.c.l.b16 %v171
    %v386 = vunpack.c.l.b16 %v172
    %v387 = vunpack.c.h.b16 %v172
    %v388 = vunpack.c.l.b16 %v173
    %v389 = vunpack.c.l.b16 %v174
    %v390 = vunpack.c.h.b16 %v174
    %v391 = vunpack.c.l.b16 %v175
    %v392 = vunpack.c.l.b16 %v176
    %v393 = vunpack.c.h.b16 %v176
    %v394 = vunpack.c.l.b16 %v177
    %v395 = vunpack.c.l.b16 %v178
    %v396 = vunpack.c.h.b16 %v178
    %v397 = vunpack.c.l.b16 %v179
    %v398 = vunpack.c.l.b16 %v180
    %v399 = vunpack.c.h.b16 %v180
    %v400 = vunpack.c.l.b16 %v181
    %v401 = vunpack.c.l.b16 %v182
    %v402 = vunpack.c.h.b16 %v182
    %v403 = vunpack.c.l.b16 %v183
    %v404 = vunpack.c.l.b16 %v184
    %v405 = vunpack.c.h.b16 %v184
    %v406 = vunpack.c.l.b16 %v185
    %v407 = vunpack.c.l.b16 %v186
    %v408 = vunpack.c.h.b16 %v186
    %v409 = vunpack.c.l.b16 %v187
    %v410 = vunpack.c.l.b16 %v188
    %v411 = vunpack.c.h.b16 %v188
    %v412 = vunpack.c.l.b16 %v189
    %v413 = vunpack.c.l.b16 %v190
    %v414 = vunpack.c.h.b16 %v190
    %v415 = vunpack.c.l.b16 %v191
    %v416 = vunpack.c.l.b16 %v192
    %v417 = vunpack.c.h.b16 %v192
    %v418 = vunpack.c.l.b16 %v193
    %v419 = vunpack.c.l.b16 %v194
    %v420 = vunpack.c.h.b16 %v194
    %v421 = vunpack.c.l.b16 %v195
    %v422 = vunpack.c.l.b16 %v196
    %v423 = vunpack.c.h.b16 %v196
    %v424 = vunpack.c.l.b16 %v197
    %v425 = vunpack.c.l.b16 %v198
    %v426 = vunpack.c.h.b16 %v198
    %v427 = vunpack.c.l.b16 %v199
    %v428 = vunpack.c.l.b16 %v200
    %v429 = vunpack.c.h.b16 %v200
    %v430 = vunpack.c.l.b16 %v201
    %v431 = vunpack.c.l.b16 %v202
    %v432 = vunpack.c.h.b16 %v202
    %v433 = vunpack.c.l.b16 %v203
    %v434 = vunpack.c.l.b16 %v204
    %v435 = vunpack.c.h.b16 %v204
    %v436 = vunpack.c.l.b16 %v205
    %v437 = vunpack.c.l.b16 %v206
    %v438 = vunpack.c.h.b16 %v206
    %v439 = vunpack.c.l.b16 %v207
    %v440 = vunpack.c.l.b16 %v208
    %v441 = vunpack.c.h.b16 %v208
    %v442 = vunpack.c.l.b16 %v209
    %v443 = vunpack.c.l.b16 %v210
    %v444 = vunpack.c.h.b16 %v210
    %v445 = vunpack.c.l.b16 %v211
    %v446 = vunpack.c.l.b16 %v212
    %v447 = vunpack.c.h.b16 %v212
    %v448 = vunpack.c.l.b16 %v213
    %v449 = vunpack.c.l.b16 %v214
    %v450 = vunpack.c.h.b16 %v214
    %v451 = vunpack.c.l.b16 %v215
    %v452 = vunpack.c.l.b16 %v216
    %v453 = vunpack.c.h.b16 %v216
    %v454 = vunpack.c.l.b16 %v217
    %v455 = vunpack.c.l.b16 %v218
    %v456 = vunpack.c.h.b16 %v218
    %v457 = vunpack.c.l.b16 %v219
    %v458 = vunpack.c.l.b16 %v220
    %v459 = vunpack.c.h.b16 %v220
    %v460 = vunpack.c.l.b16 %v221
    %v461 = vunpack.c.l.b16 %v222
    %v462 = vunpack.c.h.b16 %v222
    %v463 = vunpack.c.l.b16 %v223
    %v464 = vunpack.c.l.b16 %v224
    %v465 = vunpack.c.h.b16 %v224
    %v466 = vunpack.c.l.b16 %v225
    %v467 = vunpack.c.l.b16 %v226
    %v468 = vunpack.c.h.b16 %v226
    %v469 = vunpack.c.l.b16 %v227
    %v470 = vunpack.c.l.b16 %v228
    %v471 = vunpack.c.h.b16 %v228
    %v472 = vunpack.c.l.b16 %v229
    %v473 = vunpack.c.l.b16 %v230
    %v474 = vunpack.c.h.b16 %v230
    %v475 = vunpack.c.l.b16 %v231
    %v476 = vunpack.c.l.b16 %v232
    %v477 = vunpack.c.h.b16 %v232
    %v478 = vunpack.c.l.b16 %v233
    %v479 = vunpack.c.l.b16 %v234
    %v480 = vunpack.c.h.b16 %v234
    %v481 = vunpack.c.l.b16 %v235
    %v482 = vunpack.c.l.b16 %v236
    %v483 = vunpack.c.h.b16 %v236
    %v484 = vunpack.c.l.b16 %v237
    %v485 = vunpack.c.l.b16 %v238
    %v486 = vunpack.c.h.b16 %v238
    %v487 = vunpack.c.l.b16 %v239
    %v488 = vunpack.c.l.b16 %v240
    %v489 = vunpack.c.h.b16 %v240
    %v490 = vunpack.c.l.b16 %v241
    %v491 = vunpack.c.l.b16 %v242
    %v492 = vunpack.c.h.b16 %v242
    %v493 = vunpack.c.l.b16 %v243
    %v494 = vpack.c.b16 %v347, %v344
    %v495 = vpack.c.b16 %v348, %v345
    %v496 = vpack.c.b16 %v349, %v346
    %v497 = vpack.c.b16 %v353, %v350
    %v498 = vpack.c.b16 %v354, %v351
    %v499 = vpack.c.b16 %v355, %v352
    %v500 = vpack.c.b16 %v359, %v356
    %v501 = vpack.c.b16 %v360, %v357
    %v502 = vpack.c.b16 %v361, %v358
    %v503 = vpack.c.b16 %v365, %v362
    %v504 = vpack.c.b16 %v366, %v363
    %v505 = vpack.c.b16 %v367, %v364
    %v506 = vpack.c.b16 %v371, %v368
    %v507 = vpack.c.b16 %v372, %v369
    %v508 = vpack.c.b16 %v373, %v370
    %v509 = vpack.c.b16 %v377, %v374
    %v510 = vpack.c.b16 %v378, %v375
    %v511 = vpack.c.b16 %v379, %v376
    %v512 = vpack.c.b16 %v383, %v380
    %v513 = vpack.c.b16 %v384, %v381
    %v514 = vpack.c.b16 %v385, %v382
    %v515 = vpack.c.b16 %v389, %v386
    %v516 = vpack.c.b16 %v390, %v387
    %v517 = vpack.c.b16 %v391, %v388
    %v518 = vpack.c.b16 %v395, %v392
    %v519 = vpack.c.b16 %v396, %v393
    %v520 = vpack.c.b16 %v397, %v394
    %v521 = vpack.c.b16 %v401, %v398
    %v522 = vpack.c.b16 %v402, %v399
    %v523 = vpack.c.b16 %v403, %v400
    %v524 = vpack.c.b16 %v407, %v404
    %v525 = vpack.c.b16 %v408, %v405
    %v526 = vpack.c.b16 %v409, %v406
    %v527 = vpack.c.b16 %v413, %v410
    %v528 = vpack.c.b16 %v414, %v411
    %v529 = vpack.c.b16 %v415, %v412
    %v530 = vpack.c.b16 %v419, %v416
    %v531 = vpack.c.b16 %v420, %v417
    %v532 = vpack.c.b16 %v421, %v418
    %v533 = vpack.c.b16 %v425, %v422
    %v534 = vpack.c.b16 %v426, %v423
    %v535 = vpack.c.b16 %v427, %v424
    %v536 = vpack.c.b16 %v431, %v428
    %v537 = vpack.c.b16 %v432, %v429
    %v538 = vpack.c.b16 %v433, %v430
    %v539 = vpack.c.b16 %v437, %v434
    %v540 = vpack.c.b16 %v438, %v435
    %v541 = vpack.c.b16 %v439, %v436
    %v542 = vpack.c.b16 %v443, %v440
    %v543 = vpack.c.b16 %v444, %v441
    %v544 = vpack.c.b16 %v445, %v442
    %v545 = vpack.c.b16 %v449, %v446
    %v546 = vpack.c.b16 %v450, %v447
    %v547 = vpack.c.b16 %v451, %v448
    %v548 = vpack.c.b16 %v455, %v452
    %v549 = vpack.c.b16 %v456, %v453
    %v550 = vpack.c.b16 %v457, %v454
    %v551 = vpack.c.b16 %v461, %v458
    %v552 = vpack.c.b16 %v462, %v459
    %v553 = vpack.c.b16 %v463, %v460
    %v554 = vpack.c.b16 %v467, %v464
    %v555 = vpack.c.b16 %v468, %v465
    %v556 = vpack.c.b16 %v469, %v466
    %v557 = vpack.c.b16 %v473, %v470
    %v558 = vpack.c.b16 %v474, %v471
    %v559 = vpack.c.b16 %v475, %v472
    %v560 = vpack.c.b16 %v479, %v476
    %v561 = vpack.c.b16 %v480, %v477
    %v562 = vpack.c.b16 %v481, %v478
    %v563 = vpack.c.b16 %v485, %v482
    %v564 = vpack.c.b16 %v486, %v483
    %v565 = vpack.c.b16 %v487, %v484
    %v566 = vpack.c.b16 %v491, %v488
    %v567 = vpack.c.b16 %v492, %v489
    %v568 = vpack.c.b16 %v493, %v490
    %vm644 = vcmask 130048
    %v646 = vsel %vm644, %v143, 0
    %648 = vmatprep.subr.bf16.mxu0 %v516
    %649 = vmatpush1.bf16.msra.mxu0 %v515
    %650 = vmatprep.subr.bf16.mxu0 %v513
    %651 = vmatpush1.bf16.msra.mxu0 %v512
    %652 = vmatprep.subr.bf16.mxu0 %v510
    %653 = vmatpush1.bf16.msra.mxu0 %v509
    %654 = vmatprep.subr.bf16.mxu0 %v507
    %655 = vmatpush1.bf16.msra.mxu0 %v506
    %656 = vmatprep.subr.bf16.mxu0 %v504
    %657 = vmatpush1.bf16.msra.mxu0 %v503
    %658 = vmatprep.subr.bf16.mxu0 %v501
    %659 = vmatpush1.bf16.msra.mxu0 %v500
    %660 = vmatprep.subr.bf16.mxu0 %v498
    %661 = vmatpush1.bf16.msra.mxu0 %v497
    %662 = vmatprep.subr.bf16.mxu0 %v495
    %663 = vmatpush1.bf16.msra.mxu0 %v494
    %664 = vmatprep.subr.bf16.mxu0 %v540
    %665 = vmatpush2.bf16.msra.mxu0 %v539
    %666 = vmatprep.subr.bf16.mxu0 %v537
    %667 = vmatpush2.bf16.msra.mxu0 %v536
    %668 = vmatprep.subr.bf16.mxu0 %v534
    %669 = vmatpush2.bf16.msra.mxu0 %v533
    %670 = vmatprep.subr.bf16.mxu0 %v531
    %671 = vmatpush2.bf16.msra.mxu0 %v530
    %672 = vmatprep.subr.bf16.mxu0 %v528
    %673 = vmatpush2.bf16.msra.mxu0 %v527
    %674 = vmatprep.subr.bf16.mxu0 %v525
    %675 = vmatpush2.bf16.msra.mxu0 %v524
    %676 = vmatprep.subr.bf16.mxu0 %v522
    %677 = vmatpush2.bf16.msra.mxu0 %v521
    %678 = vmatprep.subr.bf16.mxu0 %v519
    %679 = vmatpush2.bf16.msra.mxu0 %v518
    %680 = vmatprep.mubr.bf16.mxu0 %v141
    %681 = vmatmul.mubr.bf16.gmra.mxu0 %v140
    %v682 = vpop.f32.mrf.mxu0
    %v683 = vadd.f32 0.0, %v682
    %v684 = vpop.f32.mrf.mxu0
    %v685 = vadd.f32 0.0, %v684
    %v686 = vpop.f32.mrf.mxu0
    %v687 = vpop.f32.mrf.mxu0
    %688 = vdwg.mxu0
    %689 = vmatprep.subr.bf16.mxu0 %v564
    %690 = vmatpush1.bf16.msra.mxu0 %v563
    %691 = vmatprep.subr.bf16.mxu0 %v561
    %692 = vmatpush1.bf16.msra.mxu0 %v560
    %693 = vmatprep.subr.bf16.mxu0 %v558
    %694 = vmatpush1.bf16.msra.mxu0 %v557
    %695 = vmatprep.subr.bf16.mxu0 %v555
    %696 = vmatpush1.bf16.msra.mxu0 %v554
    %697 = vmatprep.subr.bf16.mxu0 %v552
    %698 = vmatpush1.bf16.msra.mxu0 %v551
    %699 = vmatprep.subr.bf16.mxu0 %v549
    %700 = vmatpush1.bf16.msra.mxu0 %v548
    %701 = vmatprep.subr.bf16.mxu0 %v546
    %702 = vmatpush1.bf16.msra.mxu0 %v545
    %703 = vmatprep.subr.bf16.mxu0 %v543
    %704 = vmatpush1.bf16.msra.mxu0 %v542
    %705 = vmatprep.subr.bf16.mxu0 0
    %706 = vmatpush2.bf16.msra.mxu0 0
    %707 = vmatprep.subr.bf16.mxu0 0
    %708 = vmatpush2.bf16.msra.mxu0 0
    %709 = vmatprep.subr.bf16.mxu0 0
    %710 = vmatpush2.bf16.msra.mxu0 0
    %711 = vmatprep.subr.bf16.mxu0 0
    %712 = vmatpush2.bf16.msra.mxu0 0
    %713 = vmatprep.subr.bf16.mxu0 0
    %714 = vmatpush2.bf16.msra.mxu0 0
    %715 = vmatprep.subr.bf16.mxu0 0
    %716 = vmatpush2.bf16.msra.mxu0 0
    %717 = vmatprep.subr.bf16.mxu0 0
    %718 = vmatpush2.bf16.msra.mxu0 0
    %719 = vmatprep.subr.bf16.mxu0 %v567
    %720 = vmatpush2.bf16.msra.mxu0 %v566
    %721 = vmatprep.mubr.bf16.mxu0 %v646
    %722 = vmatmul.mubr.bf16.gmra.mxu0 %v142
    %v723 = vpop.f32.mrf.mxu0
    %v724 = vadd.f32 %v683, %v723
    %v725 = vpop.f32.mrf.mxu0
    %v726 = vadd.f32 %v685, %v725
    %v727 = vpop.f32.mrf.mxu0
    %v728 = vpop.f32.mrf.mxu0
    %729 = vdwg.mxu0
    %730 = vmatprep.subr.bf16.mxu0 0
    %731 = vmatpush1.bf16.msra.mxu0 %v517
    %732 = vmatprep.subr.bf16.mxu0 0
    %733 = vmatpush1.bf16.msra.mxu0 %v514
    %734 = vmatprep.subr.bf16.mxu0 0
    %735 = vmatpush1.bf16.msra.mxu0 %v511
    %736 = vmatprep.subr.bf16.mxu0 0
    %737 = vmatpush1.bf16.msra.mxu0 %v508
    %738 = vmatprep.subr.bf16.mxu0 0
    %739 = vmatpush1.bf16.msra.mxu0 %v505
    %740 = vmatprep.subr.bf16.mxu0 0
    %741 = vmatpush1.bf16.msra.mxu0 %v502
    %742 = vmatprep.subr.bf16.mxu0 0
    %743 = vmatpush1.bf16.msra.mxu0 %v499
    %744 = vmatprep.subr.bf16.mxu0 0
    %745 = vmatpush1.bf16.msra.mxu0 %v496
    %746 = vmatprep.subr.bf16.mxu0 0
    %747 = vmatpush2.bf16.msra.mxu0 %v541
    %748 = vmatprep.subr.bf16.mxu0 0
    %749 = vmatpush2.bf16.msra.mxu0 %v538
    %750 = vmatprep.subr.bf16.mxu0 0
    %751 = vmatpush2.bf16.msra.mxu0 %v535
    %752 = vmatprep.subr.bf16.mxu0 0
    %753 = vmatpush2.bf16.msra.mxu0 %v532
    %754 = vmatprep.subr.bf16.mxu0 0
    %755 = vmatpush2.bf16.msra.mxu0 %v529
    %756 = vmatprep.subr.bf16.mxu0 0
    %757 = vmatpush2.bf16.msra.mxu0 %v526
    %758 = vmatprep.subr.bf16.mxu0 0
    %759 = vmatpush2.bf16.msra.mxu0 %v523
    %760 = vmatprep.subr.bf16.mxu0 0
    %761 = vmatpush2.bf16.msra.mxu0 %v520
    %762 = vmatprep.mubr.bf16.mxu0 %v141
    %763 = vmatmul.mubr.bf16.gmra.mxu0 %v140
    %v764 = vpop.f32.mrf.mxu0
    %v765 = vadd.f32 0.0, %v764
    %v766 = vpop.f32.mrf.mxu0
    %v767 = vpop.f32.mrf.mxu0
    %v768 = vpop.f32.mrf.mxu0
    %769 = vdwg.mxu0
    %770 = vmatprep.subr.bf16.mxu0 0
    %771 = vmatpush1.bf16.msra.mxu0 %v565
    %772 = vmatprep.subr.bf16.mxu0 0
    %773 = vmatpush1.bf16.msra.mxu0 %v562
    %774 = vmatprep.subr.bf16.mxu0 0
    %775 = vmatpush1.bf16.msra.mxu0 %v559
    %776 = vmatprep.subr.bf16.mxu0 0
    %777 = vmatpush1.bf16.msra.mxu0 %v556
    %778 = vmatprep.subr.bf16.mxu0 0
    %779 = vmatpush1.bf16.msra.mxu0 %v553
    %780 = vmatprep.subr.bf16.mxu0 0
    %781 = vmatpush1.bf16.msra.mxu0 %v550
    %782 = vmatprep.subr.bf16.mxu0 0
    %783 = vmatpush1.bf16.msra.mxu0 %v547
    %784 = vmatprep.subr.bf16.mxu0 0
    %785 = vmatpush1.bf16.msra.mxu0 %v544
    %786 = vmatprep.subr.bf16.mxu0 0
    %787 = vmatpush2.bf16.msra.mxu0 0
    %788 = vmatprep.subr.bf16.mxu0 0
    %789 = vmatpush2.bf16.msra.mxu0 0
    %790 = vmatprep.subr.bf16.mxu0 0
    %791 = vmatpush2.bf16.msra.mxu0 0
    %792 = vmatprep.subr.bf16.mxu0 0
    %793 = vmatpush2.bf16.msra.mxu0 0
    %794 = vmatprep.subr.bf16.mxu0 0
    %795 = vmatpush2.bf16.msra.mxu0 0
    %796 = vmatprep.subr.bf16.mxu0 0
    %797 = vmatpush2.bf16.msra.mxu0 0
    %798 = vmatprep.subr.bf16.mxu0 0
    %799 = vmatpush2.bf16.msra.mxu0 0
    %800 = vmatprep.subr.bf16.mxu0 0
    %801 = vmatpush2.bf16.msra.mxu0 %v568
    %802 = vmatprep.mubr.bf16.mxu0 %v646
    %803 = vmatmul.mubr.bf16.gmra.mxu0 %v142
    %v804 = vpop.f32.mrf.mxu0
    %v805 = vadd.f32 %v765, %v804
    %v806 = vpop.f32.mrf.mxu0
    %v807 = vpop.f32.mrf.mxu0
    %v808 = vpop.f32.mrf.mxu0
    %809 = vdwg.mxu0
    %v810 = vrot.slane %v724, 4
    %v811 = vadd.f32 %v724, %v810
    %v812 = vrot.slane %v811, 2
    %v813 = vadd.f32 %v811, %v812
    %v814 = vrot.slane %v813, 1
    %v815 = vadd.f32 %v813, %v814
    %v816 = vrot.slane %v726, 4
    %v817 = vadd.f32 %v726, %v816
    %v818 = vrot.slane %v817, 2
    %v819 = vadd.f32 %v817, %v818
    %v820 = vrot.slane %v819, 1
    %v821 = vadd.f32 %v819, %v820
    %v822 = vrot.slane %v805, 4
    %v823 = vadd.f32 %v805, %v822
    %v824 = vrot.slane %v823, 2
    %v825 = vadd.f32 %v823, %v824
    %v826 = vrot.slane %v825, 1
    %v827 = vadd.f32 %v825, %v826
    %v828 = vrcp.pop 8.0
    %v829 = vmul.f32 %v815, %v828
    %v830 = vmul.f32 %v821, %v828
    %v831 = vmul.f32 %v827, %v828
    %v832 = vmul.f32 %v724, %v724
    %v833 = vmul.f32 %v726, %v726
    %v834 = vmul.f32 %v805, %v805
    %v835 = vrot.slane %v832, 4
    %v836 = vadd.f32 %v832, %v835
    %v837 = vrot.slane %v836, 2
    %v838 = vadd.f32 %v836, %v837
    %v839 = vrot.slane %v838, 1
    %v840 = vadd.f32 %v838, %v839
    %v841 = vrot.slane %v833, 4
    %v842 = vadd.f32 %v833, %v841
    %v843 = vrot.slane %v842, 2
    %v844 = vadd.f32 %v842, %v843
    %v845 = vrot.slane %v844, 1
    %v846 = vadd.f32 %v844, %v845
    %v847 = vrot.slane %v834, 4
    %v848 = vadd.f32 %v834, %v847
    %v849 = vrot.slane %v848, 2
    %v850 = vadd.f32 %v848, %v849
    %v851 = vrot.slane %v850, 1
    %v852 = vadd.f32 %v850, %v851
    %v853 = vmul.f32 %v840, %v828
    %v854 = vmul.f32 %v846, %v828
    %v855 = vmul.f32 %v852, %v828
    %v856 = vmul.f32 %v829, %v829
    %v857 = vmul.f32 %v830, %v830
    %v858 = vmul.f32 %v831, %v831
    %v859 = vsub.f32 %v853, %v856
    %v860 = vsub.f32 %v854, %v857
    %v861 = vsub.f32 %v855, %v858
    %v862 = vmax.f32 %v859, 0.0
    %v863 = vmax.f32 %v860, 0.0
    %v864 = vmax.f32 %v861, 0.0
    %v865 = vadd.f32 %v862, 1e-05
    %v866 = vadd.f32 %v863, 1e-05
    %v867 = vadd.f32 %v864, 1e-05
    %v868 = vrsqrt.pop %v865
    %v869 = vrsqrt.pop %v866
    %v870 = vrsqrt.pop %v867
    %v871 = vld [vmem:[#allocation14] sm:$0x7]
    %v873 = vlaneseq
    %v874 = vshrl.u32 %v873, 7
    %v875 = vsub.s32 0, %v874
    %v876 = vrot.slane %v871, %v875
    %v877 = vlaneseq
    %v878 = vshrl.u32 %v877, 7
    %v879 = vsub.s32 1, %v878
    %v880 = vrot.slane %v871, %v879
    %v881 = vlaneseq
    %v882 = vshrl.u32 %v881, 7
    %v883 = vsub.s32 2, %v882
    %v884 = vrot.slane %v871, %v883
    %v888 = vmul.f32 %v868, %v876
    %v889 = vmul.f32 %v869, %v880
    %v890 = vmul.f32 %v870, %v884
    %v891 = vld [vmem:[#allocation14 + $0x3] sm:$0x7]
    %v892 = vmul.f32 %v829, %v888
    %v893 = vmul.f32 %v830, %v889
    %v894 = vmul.f32 %v831, %v890
    %v898 = vcombine.low %v892, %v893
    %v900 = vunpack.c.l.s4 1966171168
    %v901 = vunpack.c.0.s8 %v900
    %v902 = vlaneseq
    %v903 = vshrl.u32 %v902, 7
    %v904 = vsub.s32 %v901, %v903
    %v905 = vrot.slane %v898, %v904
    %v907 = vunpack.c.l.s4 1966171168
    %v908 = vunpack.c.0.s8 %v907
    %v909 = vlaneseq
    %v910 = vshrl.u32 %v909, 7
    %v911 = vsub.s32 %v908, %v910
    %v912 = vrot.slane %v894, %v911
    %v913 = vcombine.low %v905, %v912
    %v915 = vunpack.c.l.s4 1966171168
    %v916 = vunpack.c.0.s8 %v915
    %v917 = vlaneseq
    %v918 = vshrl.u32 %v917, 7
    %v919 = vsub.s32 %v916, %v918
    %v920 = vrot.slane %v913, %v919
    %v922 = vsub.f32 %v891, %v920
    %v923 = vlaneseq
    %v924 = vshrl.u32 %v923, 7
    %v925 = vsub.s32 0, %v924
    %v926 = vrot.slane %v888, %v925
    %v927 = vlaneseq
    %v928 = vshrl.u32 %v927, 7
    %v929 = vsub.s32 0, %v928
    %v930 = vrot.slane %v889, %v929
    %v931 = vlaneseq
    %v932 = vshrl.u32 %v931, 7
    %v933 = vsub.s32 0, %v932
    %v934 = vrot.slane %v890, %v933
    %v935 = vmul.f32 %v724, %v926
    %v936 = vmul.f32 %v726, %v930
    %v937 = vmul.f32 %v805, %v934
    %v939 = vlaneseq
    %v940 = vshrl.u32 %v939, 7
    %v941 = vsub.s32 0, %v940
    %v942 = vrot.slane %v922, %v941
    %v943 = vlaneseq
    %v944 = vshrl.u32 %v943, 7
    %v945 = vsub.s32 1, %v944
    %v946 = vrot.slane %v922, %v945
    %v947 = vlaneseq
    %v948 = vshrl.u32 %v947, 7
    %v949 = vsub.s32 2, %v948
    %v950 = vrot.slane %v922, %v949
    %v954 = vadd.f32 %v935, %v942
    %v955 = vadd.f32 %v936, %v946
    %v956 = vadd.f32 %v937, %v950
    %v957 = vmax.f32 %v954, 0.0
    %v958 = vmax.f32 %v955, 0.0
    %v959 = vmax.f32 %v956, 0.0
    %v960 = vpack.c.bf16 %v957, %v957
    %v961 = vpack.c.bf16 %v958, %v958
    %v962 = vpack.c.bf16 %v959, %v959
    %v963 = vld [vmem:[#allocation7] sm:$0xf]
    %v964 = vld [vmem:[#allocation7 + $0x4] sm:$0xf]
    %v965 = vld [vmem:[#allocation7 + $0x8] sm:$0xf]
    %v966 = vld [vmem:[#allocation7 + $0xc] sm:$0xf]
    %v967 = vld [vmem:[#allocation7 + $0x10] sm:$0xf]
    %v968 = vld [vmem:[#allocation7 + $0x14] sm:$0xf]
    %v969 = vld [vmem:[#allocation7 + $0x18] sm:$0xf]
    %v970 = vld [vmem:[#allocation7 + $0x1c] sm:$0xf]
    %v971 = vld [vmem:[#allocation7 + $0x20] sm:$0xf]
    %v972 = vld [vmem:[#allocation7 + $0x24] sm:$0xf]
    %v973 = vld [vmem:[#allocation7 + $0x28] sm:$0xf]
    %v974 = vld [vmem:[#allocation7 + $0x2c] sm:$0xf]
    %v975 = vld [vmem:[#allocation7 + $0x30] sm:$0xf]
    %v976 = vld [vmem:[#allocation7 + $0x34] sm:$0xf]
    %v977 = vld [vmem:[#allocation7 + $0x38] sm:$0xf]
    %v978 = vld [vmem:[#allocation7 + $0x3c] sm:$0xf]
    %v979 = vld [vmem:[#allocation7 + $0x40] sm:$0xf]
    %v980 = vld [vmem:[#allocation7 + $0x44] sm:$0xf]
    %v981 = vld [vmem:[#allocation7 + $0x48] sm:$0xf]
    %v982 = vld [vmem:[#allocation7 + $0x4c] sm:$0xf]
    %v983 = vld [vmem:[#allocation7 + $0x50] sm:$0xf]
    %v984 = vld [vmem:[#allocation7 + $0x54] sm:$0xf]
    %v985 = vld [vmem:[#allocation7 + $0x58] sm:$0xf]
    %v986 = vld [vmem:[#allocation7 + $0x5c] sm:$0xf]
    %v987 = vld [vmem:[#allocation7 + $0x60] sm:$0xf]
    %v988 = vld [vmem:[#allocation7 + $0x64] sm:$0xf]
    %v989 = vld [vmem:[#allocation7 + $0x68] sm:$0xf]
    %v990 = vld [vmem:[#allocation7 + $0x6c] sm:$0xf]
    %v991 = vld [vmem:[#allocation7 + $0x70] sm:$0xf]
    %v992 = vld [vmem:[#allocation7 + $0x74] sm:$0xf]
    %v993 = vld [vmem:[#allocation7 + $0x78] sm:$0xf]
    %v994 = vld [vmem:[#allocation7 + $0x7c] sm:$0xf]
    %v995 = vld [vmem:[#allocation7 + $0x80] sm:$0xf]
    %v996 = vld [vmem:[#allocation7 + $0x84] sm:$0xf]
    %v997 = vld [vmem:[#allocation7 + $0x88] sm:$0xf]
    %v998 = vld [vmem:[#allocation7 + $0x8c] sm:$0xf]
    %v999 = vld [vmem:[#allocation7 + $0x90] sm:$0xf]
    %v1000 = vld [vmem:[#allocation7 + $0x94] sm:$0xf]
    %v1001 = vld [vmem:[#allocation7 + $0x98] sm:$0xf]
    %v1002 = vld [vmem:[#allocation7 + $0x9c] sm:$0xf]
    %v1003 = vld [vmem:[#allocation7 + $0xa0] sm:$0xf]
    %v1004 = vld [vmem:[#allocation7 + $0xa4] sm:$0xf]
    %v1005 = vld [vmem:[#allocation7 + $0xa8] sm:$0xf]
    %v1006 = vld [vmem:[#allocation7 + $0xac] sm:$0xf]
    %v1007 = vld [vmem:[#allocation7 + $0xb0] sm:$0xf]
    %v1008 = vld [vmem:[#allocation7 + $0xb4] sm:$0xf]
    %v1009 = vld [vmem:[#allocation7 + $0xb8] sm:$0xf]
    %v1010 = vld [vmem:[#allocation7 + $0xbc] sm:$0xf]
    %v1059 = vunpack.c.l.b16 %v963
    %v1060 = vunpack.c.l.b16 %v964
    %v1061 = vunpack.c.l.b16 %v965
    %v1062 = vunpack.c.l.b16 %v966
    %v1063 = vunpack.c.l.b16 %v967
    %v1064 = vunpack.c.l.b16 %v968
    %v1065 = vunpack.c.l.b16 %v969
    %v1066 = vunpack.c.l.b16 %v970
    %v1067 = vunpack.c.l.b16 %v971
    %v1068 = vunpack.c.l.b16 %v972
    %v1069 = vunpack.c.l.b16 %v973
    %v1070 = vunpack.c.l.b16 %v974
    %v1071 = vunpack.c.l.b16 %v975
    %v1072 = vunpack.c.l.b16 %v976
    %v1073 = vunpack.c.l.b16 %v977
    %v1074 = vunpack.c.l.b16 %v978
    %v1075 = vunpack.c.l.b16 %v979
    %v1076 = vunpack.c.l.b16 %v980
    %v1077 = vunpack.c.l.b16 %v981
    %v1078 = vunpack.c.l.b16 %v982
    %v1079 = vunpack.c.l.b16 %v983
    %v1080 = vunpack.c.l.b16 %v984
    %v1081 = vunpack.c.l.b16 %v985
    %v1082 = vunpack.c.l.b16 %v986
    %v1083 = vunpack.c.l.b16 %v987
    %v1084 = vunpack.c.l.b16 %v988
    %v1085 = vunpack.c.l.b16 %v989
    %v1086 = vunpack.c.l.b16 %v990
    %v1087 = vunpack.c.l.b16 %v991
    %v1088 = vunpack.c.l.b16 %v992
    %v1089 = vunpack.c.l.b16 %v993
    %v1090 = vunpack.c.l.b16 %v994
    %v1091 = vunpack.c.l.b16 %v995
    %v1092 = vunpack.c.l.b16 %v996
    %v1093 = vunpack.c.l.b16 %v997
    %v1094 = vunpack.c.l.b16 %v998
    %v1095 = vunpack.c.l.b16 %v999
    %v1096 = vunpack.c.l.b16 %v1000
    %v1097 = vunpack.c.l.b16 %v1001
    %v1098 = vunpack.c.l.b16 %v1002
    %v1099 = vunpack.c.l.b16 %v1003
    %v1100 = vunpack.c.l.b16 %v1004
    %v1101 = vunpack.c.l.b16 %v1005
    %v1102 = vunpack.c.l.b16 %v1006
    %v1103 = vunpack.c.l.b16 %v1007
    %v1104 = vunpack.c.l.b16 %v1008
    %v1105 = vunpack.c.l.b16 %v1009
    %v1106 = vunpack.c.l.b16 %v1010
    %v1107 = vpack.c.b16 %v1060, %v1059
    %v1108 = vpack.c.b16 %v1062, %v1061
    %v1109 = vpack.c.b16 %v1064, %v1063
    %v1110 = vpack.c.b16 %v1066, %v1065
    %v1111 = vpack.c.b16 %v1068, %v1067
    %v1112 = vpack.c.b16 %v1070, %v1069
    %v1113 = vpack.c.b16 %v1072, %v1071
    %v1114 = vpack.c.b16 %v1074, %v1073
    %v1115 = vpack.c.b16 %v1076, %v1075
    %v1116 = vpack.c.b16 %v1078, %v1077
    %v1117 = vpack.c.b16 %v1080, %v1079
    %v1118 = vpack.c.b16 %v1082, %v1081
    %v1119 = vpack.c.b16 %v1084, %v1083
    %v1120 = vpack.c.b16 %v1086, %v1085
    %v1121 = vpack.c.b16 %v1088, %v1087
    %v1122 = vpack.c.b16 %v1090, %v1089
    %v1123 = vpack.c.b16 %v1092, %v1091
    %v1124 = vpack.c.b16 %v1094, %v1093
    %v1125 = vpack.c.b16 %v1096, %v1095
    %v1126 = vpack.c.b16 %v1098, %v1097
    %v1127 = vpack.c.b16 %v1100, %v1099
    %v1128 = vpack.c.b16 %v1102, %v1101
    %v1129 = vpack.c.b16 %v1104, %v1103
    %v1130 = vpack.c.b16 %v1106, %v1105
    %1155 = vmatprep.subr.bf16.mxu0 0
    %1156 = vmatpush1.bf16.msra.mxu0 %v1114
    %1157 = vmatprep.subr.bf16.mxu0 0
    %1158 = vmatpush1.bf16.msra.mxu0 %v1113
    %1159 = vmatprep.subr.bf16.mxu0 0
    %1160 = vmatpush1.bf16.msra.mxu0 %v1112
    %1161 = vmatprep.subr.bf16.mxu0 0
    %1162 = vmatpush1.bf16.msra.mxu0 %v1111
    %1163 = vmatprep.subr.bf16.mxu0 0
    %1164 = vmatpush1.bf16.msra.mxu0 %v1110
    %1165 = vmatprep.subr.bf16.mxu0 0
    %1166 = vmatpush1.bf16.msra.mxu0 %v1109
    %1167 = vmatprep.subr.bf16.mxu0 0
    %1168 = vmatpush1.bf16.msra.mxu0 %v1108
    %1169 = vmatprep.subr.bf16.mxu0 0
    %1170 = vmatpush1.bf16.msra.mxu0 %v1107
    %1171 = vmatprep.subr.bf16.mxu0 0
    %1172 = vmatpush2.bf16.msra.mxu0 %v1122
    %1173 = vmatprep.subr.bf16.mxu0 0
    %1174 = vmatpush2.bf16.msra.mxu0 %v1121
    %1175 = vmatprep.subr.bf16.mxu0 0
    %1176 = vmatpush2.bf16.msra.mxu0 %v1120
    %1177 = vmatprep.subr.bf16.mxu0 0
    %1178 = vmatpush2.bf16.msra.mxu0 %v1119
    %1179 = vmatprep.subr.bf16.mxu0 0
    %1180 = vmatpush2.bf16.msra.mxu0 %v1118
    %1181 = vmatprep.subr.bf16.mxu0 0
    %1182 = vmatpush2.bf16.msra.mxu0 %v1117
    %1183 = vmatprep.subr.bf16.mxu0 0
    %1184 = vmatpush2.bf16.msra.mxu0 %v1116
    %1185 = vmatprep.subr.bf16.mxu0 0
    %1186 = vmatpush2.bf16.msra.mxu0 %v1115
    %1187 = vmatprep.mubr.bf16.mxu0 %v961
    %1188 = vmatmul.mubr.bf16.gmra.mxu0 %v960
    %v1189 = vpop.f32.mrf.mxu0
    %v1190 = vadd.f32 0.0, %v1189
    %v1191 = vpop.f32.mrf.mxu0
    %v1192 = vpop.f32.mrf.mxu0
    %v1193 = vpop.f32.mrf.mxu0
    %1194 = vdwg.mxu0
    %1195 = vmatprep.subr.bf16.mxu0 0
    %1196 = vmatpush1.bf16.msra.mxu0 %v1130
    %1197 = vmatprep.subr.bf16.mxu0 0
    %1198 = vmatpush1.bf16.msra.mxu0 %v1129
    %1199 = vmatprep.subr.bf16.mxu0 0
    %1200 = vmatpush1.bf16.msra.mxu0 %v1128
    %1201 = vmatprep.subr.bf16.mxu0 0
    %1202 = vmatpush1.bf16.msra.mxu0 %v1127
    %1203 = vmatprep.subr.bf16.mxu0 0
    %1204 = vmatpush1.bf16.msra.mxu0 %v1126
    %1205 = vmatprep.subr.bf16.mxu0 0
    %1206 = vmatpush1.bf16.msra.mxu0 %v1125
    %1207 = vmatprep.subr.bf16.mxu0 0
    %1208 = vmatpush1.bf16.msra.mxu0 %v1124
    %1209 = vmatprep.subr.bf16.mxu0 0
    %1210 = vmatpush1.bf16.msra.mxu0 %v1123
    %1211 = vmatprep.subr.bf16.mxu0 0
    %1212 = vmatpush2.bf16.msra.mxu0 0
    %1213 = vmatprep.subr.bf16.mxu0 0
    %1214 = vmatpush2.bf16.msra.mxu0 0
    %1215 = vmatprep.subr.bf16.mxu0 0
    %1216 = vmatpush2.bf16.msra.mxu0 0
    %1217 = vmatprep.subr.bf16.mxu0 0
    %1218 = vmatpush2.bf16.msra.mxu0 0
    %1219 = vmatprep.subr.bf16.mxu0 0
    %1220 = vmatpush2.bf16.msra.mxu0 0
    %1221 = vmatprep.subr.bf16.mxu0 0
    %1222 = vmatpush2.bf16.msra.mxu0 0
    %1223 = vmatprep.subr.bf16.mxu0 0
    %1224 = vmatpush2.bf16.msra.mxu0 0
    %1225 = vmatprep.subr.bf16.mxu0 0
    %1226 = vmatpush2.bf16.msra.mxu0 0
    %1227 = vmatprep.mubr.bf16.mxu0 0
    %1228 = vmatmul.mubr.bf16.gmra.mxu0 %v962
    %v1229 = vpop.f32.mrf.mxu0
    %v1230 = vadd.f32 %v1190, %v1229
    %v1231 = vpop.f32.mrf.mxu0
    %v1232 = vpop.f32.mrf.mxu0
    %v1233 = vpop.f32.mrf.mxu0
    %1234 = vdwg.mxu0
    %v1235 = vrot.slane %v1230, 4
    %v1236 = vadd.f32 %v1230, %v1235
    %v1237 = vrot.slane %v1236, 2
    %v1238 = vadd.f32 %v1236, %v1237
    %v1239 = vrot.slane %v1238, 1
    %v1240 = vadd.f32 %v1238, %v1239
    %v1241 = vmul.f32 %v1240, %v828
    %v1242 = vmul.f32 %v1230, %v1230
    %v1243 = vrot.slane %v1242, 4
    %v1244 = vadd.f32 %v1242, %v1243
    %v1245 = vrot.slane %v1244, 2
    %v1246 = vadd.f32 %v1244, %v1245
    %v1247 = vrot.slane %v1246, 1
    %v1248 = vadd.f32 %v1246, %v1247
    %v1249 = vmul.f32 %v1248, %v828
    %v1250 = vmul.f32 %v1241, %v1241
    %v1251 = vsub.f32 %v1249, %v1250
    %v1252 = vmax.f32 %v1251, 0.0
    %v1253 = vadd.f32 %v1252, 1e-05
    %v1254 = vrsqrt.pop %v1253
    %v1255 = vld [vmem:[#allocation14 + $0x6] sm:$0x1]
    %v1256 = vmul.f32 %v1254, %v1255
    %v1257 = vld [vmem:[#allocation14 + $0x7] sm:$0x1]
    %v1258 = vmul.f32 %v1241, %v1256
    %v1259 = vsub.f32 %v1257, %v1258
    %v1260 = vlaneseq
    %v1261 = vshrl.u32 %v1260, 7
    %v1262 = vsub.s32 0, %v1261
    %v1263 = vrot.slane %v1256, %v1262
    %v1264 = vmul.f32 %v1230, %v1263
    %v1266 = vlaneseq
    %v1267 = vshrl.u32 %v1266, 7
    %v1268 = vsub.s32 0, %v1267
    %v1269 = vrot.slane %v1259, %v1268
    %v1271 = vadd.f32 %v1264, %v1269
    %v1272 = vmax.f32 %v1271, 0.0
    %v1273 = vpack.c.bf16 %v1272, %v1272
    %v1274 = vld [vmem:[#allocation14 + $0x8] sm:$0x1]
    %v1275 = vld [vmem:[#allocation8] sm:$0xf]
    %v1276 = vld [vmem:[#allocation8 + $0x4] sm:$0xf]
    %v1277 = vld [vmem:[#allocation8 + $0x8] sm:$0xf]
    %v1278 = vld [vmem:[#allocation8 + $0xc] sm:$0xf]
    %v1279 = vld [vmem:[#allocation8 + $0x10] sm:$0xf]
    %v1280 = vld [vmem:[#allocation8 + $0x14] sm:$0xf]
    %v1281 = vld [vmem:[#allocation8 + $0x18] sm:$0xf]
    %v1282 = vld [vmem:[#allocation8 + $0x1c] sm:$0xf]
    %v1283 = vld [vmem:[#allocation8 + $0x20] sm:$0xf]
    %v1284 = vld [vmem:[#allocation8 + $0x24] sm:$0xf]
    %v1285 = vld [vmem:[#allocation8 + $0x28] sm:$0xf]
    %v1286 = vld [vmem:[#allocation8 + $0x2c] sm:$0xf]
    %v1287 = vld [vmem:[#allocation8 + $0x30] sm:$0xf]
    %v1288 = vld [vmem:[#allocation8 + $0x34] sm:$0xf]
    %v1289 = vld [vmem:[#allocation8 + $0x38] sm:$0xf]
    %v1290 = vld [vmem:[#allocation8 + $0x3c] sm:$0xf]
    %v1292 = vlaneseq
    %v1293 = vshrl.u32 %v1292, 7
    %v1294 = vsub.s32 0, %v1293
    %v1295 = vrot.slane %v1274, %v1294
    %v1313 = vunpack.c.l.b16 %v1275
    %v1314 = vunpack.c.l.b16 %v1276
    %v1315 = vunpack.c.l.b16 %v1277
    %v1316 = vunpack.c.l.b16 %v1278
    %v1317 = vunpack.c.l.b16 %v1279
    %v1318 = vunpack.c.l.b16 %v1280
    %v1319 = vunpack.c.l.b16 %v1281
    %v1320 = vunpack.c.l.b16 %v1282
    %v1321 = vunpack.c.l.b16 %v1283
    %v1322 = vunpack.c.l.b16 %v1284
    %v1323 = vunpack.c.l.b16 %v1285
    %v1324 = vunpack.c.l.b16 %v1286
    %v1325 = vunpack.c.l.b16 %v1287
    %v1326 = vunpack.c.l.b16 %v1288
    %v1327 = vunpack.c.l.b16 %v1289
    %v1328 = vunpack.c.l.b16 %v1290
    %v1329 = vpack.c.b16 %v1314, %v1313
    %v1330 = vpack.c.b16 %v1316, %v1315
    %v1331 = vpack.c.b16 %v1318, %v1317
    %v1332 = vpack.c.b16 %v1320, %v1319
    %v1333 = vpack.c.b16 %v1322, %v1321
    %v1334 = vpack.c.b16 %v1324, %v1323
    %v1335 = vpack.c.b16 %v1326, %v1325
    %v1336 = vpack.c.b16 %v1328, %v1327
    %1345 = vmatprep.subr.bf16.mxu0 0
    %1346 = vmatpush1.bf16.msra.mxu0 %v1336
    %1347 = vmatprep.subr.bf16.mxu0 0
    %1348 = vmatpush1.bf16.msra.mxu0 %v1335
    %1349 = vmatprep.subr.bf16.mxu0 0
    %1350 = vmatpush1.bf16.msra.mxu0 %v1334
    %1351 = vmatprep.subr.bf16.mxu0 0
    %1352 = vmatpush1.bf16.msra.mxu0 %v1333
    %1353 = vmatprep.subr.bf16.mxu0 0
    %1354 = vmatpush1.bf16.msra.mxu0 %v1332
    %1355 = vmatprep.subr.bf16.mxu0 0
    %1356 = vmatpush1.bf16.msra.mxu0 %v1331
    %1357 = vmatprep.subr.bf16.mxu0 0
    %1358 = vmatpush1.bf16.msra.mxu0 %v1330
    %1359 = vmatprep.subr.bf16.mxu0 0
    %1360 = vmatpush1.bf16.msra.mxu0 %v1329
    %1361 = vmatprep.subr.bf16.mxu0 0
    %1362 = vmatpush2.bf16.msra.mxu0 0
    %1363 = vmatprep.subr.bf16.mxu0 0
    %1364 = vmatpush2.bf16.msra.mxu0 0
    %1365 = vmatprep.subr.bf16.mxu0 0
    %1366 = vmatpush2.bf16.msra.mxu0 0
    %1367 = vmatprep.subr.bf16.mxu0 0
    %1368 = vmatpush2.bf16.msra.mxu0 0
    %1369 = vmatprep.subr.bf16.mxu0 0
    %1370 = vmatpush2.bf16.msra.mxu0 0
    %1371 = vmatprep.subr.bf16.mxu0 0
    %1372 = vmatpush2.bf16.msra.mxu0 0
    %1373 = vmatprep.subr.bf16.mxu0 0
    %1374 = vmatpush2.bf16.msra.mxu0 0
    %1375 = vmatprep.subr.bf16.mxu0 0
    %1376 = vmatpush2.bf16.msra.mxu0 0
    %1377 = vmatprep.mubr.bf16.mxu0 0
    %1378 = vmatmul.mubr.bf16.gmra.mxu0 %v1273
    %v1379 = vpop.f32.mrf.mxu0
    %v1380 = vadd.f32 %v1295, %v1379
    %v1381 = vpop.f32.mrf.mxu0
    %v1382 = vpop.f32.mrf.mxu0
    %v1383 = vpop.f32.mrf.mxu0
    %1384 = vdwg.mxu0
    %v1385 = vpack.c.bf16 %v1380, %v1380
    %v1386 = vld [vmem:[#allocation10] sm:$0xf]
    %v1387 = vld [vmem:[#allocation10 + $0x4] sm:$0xf]
    %v1388 = vld [vmem:[#allocation10 + $0x8] sm:$0xf]
    %v1389 = vld [vmem:[#allocation10 + $0xc] sm:$0xf]
    %v1390 = vld [vmem:[#allocation10 + $0x10] sm:$0xf]
    %v1391 = vld [vmem:[#allocation10 + $0x14] sm:$0xf]
    %v1392 = vld [vmem:[#allocation10 + $0x18] sm:$0xf]
    %v1393 = vld [vmem:[#allocation10 + $0x1c] sm:$0xf]
    %v1394 = vld [vmem:[#allocation10 + $0x20] sm:$0xf]
    %v1395 = vld [vmem:[#allocation10 + $0x24] sm:$0xf]
    %v1396 = vld [vmem:[#allocation10 + $0x28] sm:$0xf]
    %v1397 = vld [vmem:[#allocation10 + $0x2c] sm:$0xf]
    %v1398 = vld [vmem:[#allocation10 + $0x30] sm:$0xf]
    %v1399 = vld [vmem:[#allocation10 + $0x34] sm:$0xf]
    %v1400 = vld [vmem:[#allocation10 + $0x38] sm:$0xf]
    %v1401 = vld [vmem:[#allocation10 + $0x3c] sm:$0xf]
    %v1418 = vunpack.c.l.b16 %v1386
    %v1419 = vunpack.c.l.b16 %v1387
    %v1420 = vunpack.c.l.b16 %v1388
    %v1421 = vunpack.c.l.b16 %v1389
    %v1422 = vunpack.c.l.b16 %v1390
    %v1423 = vunpack.c.l.b16 %v1391
    %v1424 = vunpack.c.l.b16 %v1392
    %v1425 = vunpack.c.l.b16 %v1393
    %v1426 = vunpack.c.l.b16 %v1394
    %v1427 = vunpack.c.l.b16 %v1395
    %v1428 = vunpack.c.l.b16 %v1396
    %v1429 = vunpack.c.l.b16 %v1397
    %v1430 = vunpack.c.l.b16 %v1398
    %v1431 = vunpack.c.l.b16 %v1399
    %v1432 = vunpack.c.l.b16 %v1400
    %v1433 = vunpack.c.l.b16 %v1401
    %v1434 = vpack.c.b16 %v1419, %v1418
    %v1435 = vpack.c.b16 %v1421, %v1420
    %v1436 = vpack.c.b16 %v1423, %v1422
    %v1437 = vpack.c.b16 %v1425, %v1424
    %v1438 = vpack.c.b16 %v1427, %v1426
    %v1439 = vpack.c.b16 %v1429, %v1428
    %v1440 = vpack.c.b16 %v1431, %v1430
    %v1441 = vpack.c.b16 %v1433, %v1432
    %1450 = vmatprep.subr.bf16.mxu0 0
    %1451 = vmatpush1.bf16.msra.mxu0 %v1441
    %1452 = vmatprep.subr.bf16.mxu0 0
    %1453 = vmatpush1.bf16.msra.mxu0 %v1440
    %1454 = vmatprep.subr.bf16.mxu0 0
    %1455 = vmatpush1.bf16.msra.mxu0 %v1439
    %1456 = vmatprep.subr.bf16.mxu0 0
    %1457 = vmatpush1.bf16.msra.mxu0 %v1438
    %1458 = vmatprep.subr.bf16.mxu0 0
    %1459 = vmatpush1.bf16.msra.mxu0 %v1437
    %1460 = vmatprep.subr.bf16.mxu0 0
    %1461 = vmatpush1.bf16.msra.mxu0 %v1436
    %1462 = vmatprep.subr.bf16.mxu0 0
    %1463 = vmatpush1.bf16.msra.mxu0 %v1435
    %1464 = vmatprep.subr.bf16.mxu0 0
    %1465 = vmatpush1.bf16.msra.mxu0 %v1434
    %1466 = vmatprep.subr.bf16.mxu0 0
    %1467 = vmatpush2.bf16.msra.mxu0 0
    %1468 = vmatprep.subr.bf16.mxu0 0
    %1469 = vmatpush2.bf16.msra.mxu0 0
    %1470 = vmatprep.subr.bf16.mxu0 0
    %1471 = vmatpush2.bf16.msra.mxu0 0
    %1472 = vmatprep.subr.bf16.mxu0 0
    %1473 = vmatpush2.bf16.msra.mxu0 0
    %1474 = vmatprep.subr.bf16.mxu0 0
    %1475 = vmatpush2.bf16.msra.mxu0 0
    %1476 = vmatprep.subr.bf16.mxu0 0
    %1477 = vmatpush2.bf16.msra.mxu0 0
    %1478 = vmatprep.subr.bf16.mxu0 0
    %1479 = vmatpush2.bf16.msra.mxu0 0
    %1480 = vmatprep.subr.bf16.mxu0 0
    %1481 = vmatpush2.bf16.msra.mxu0 0
    %1482 = vmatprep.mubr.bf16.mxu0 0
    %1483 = vmatmul.mubr.bf16.gmra.mxu0 %v1385
    %v1484 = vpop.f32.mrf.mxu0
    %v1485 = vadd.f32 0.0, %v1484
    %v1486 = vpop.f32.mrf.mxu0
    %v1487 = vpop.f32.mrf.mxu0
    %v1488 = vpop.f32.mrf.mxu0
    %1489 = vdwg.mxu0
    %v1490 = vrot.slane %v1485, 4
    %v1491 = vadd.f32 %v1485, %v1490
    %v1492 = vrot.slane %v1491, 2
    %v1493 = vadd.f32 %v1491, %v1492
    %v1494 = vrot.slane %v1493, 1
    %v1495 = vadd.f32 %v1493, %v1494
    %v1496 = vmul.f32 %v1495, %v828
    %v1497 = vmul.f32 %v1485, %v1485
    %v1498 = vrot.slane %v1497, 4
    %v1499 = vadd.f32 %v1497, %v1498
    %v1500 = vrot.slane %v1499, 2
    %v1501 = vadd.f32 %v1499, %v1500
    %v1502 = vrot.slane %v1501, 1
    %v1503 = vadd.f32 %v1501, %v1502
    %v1504 = vmul.f32 %v1503, %v828
    %v1505 = vmul.f32 %v1496, %v1496
    %v1506 = vsub.f32 %v1504, %v1505
    %v1507 = vmax.f32 %v1506, 0.0
    %v1508 = vadd.f32 %v1507, 1e-05
    %v1509 = vrsqrt.pop %v1508
    %v1510 = vld [vmem:[#allocation14 + $0x9] sm:$0x1]
    %v1511 = vmul.f32 %v1509, %v1510
    %v1512 = vld [vmem:[#allocation14 + $0xa] sm:$0x1]
    %v1513 = vmul.f32 %v1496, %v1511
    %v1514 = vsub.f32 %v1512, %v1513
    %v1515 = vlaneseq
    %v1516 = vshrl.u32 %v1515, 7
    %v1517 = vsub.s32 0, %v1516
    %v1518 = vrot.slane %v1511, %v1517
    %v1519 = vmul.f32 %v1485, %v1518
    %v1521 = vlaneseq
    %v1522 = vshrl.u32 %v1521, 7
    %v1523 = vsub.s32 0, %v1522
    %v1524 = vrot.slane %v1514, %v1523
    %v1526 = vadd.f32 %v1519, %v1524
    %v1527 = vmax.f32 %v1526, 0.0
    %v1528 = vpack.c.bf16 %v1527, %v1527
    %v1529 = vld [vmem:[#allocation11] sm:$0xff]
    %v1530 = vld [vmem:[#allocation11 + $0x8] sm:$0xf]
    %v1531 = vld [vmem:[#allocation11 + $0xc] sm:$0xff]
    %v1532 = vld [vmem:[#allocation11 + $0x14] sm:$0xf]
    %v1533 = vld [vmem:[#allocation11 + $0x18] sm:$0xff]
    %v1534 = vld [vmem:[#allocation11 + $0x20] sm:$0xf]
    %v1535 = vld [vmem:[#allocation11 + $0x24] sm:$0xff]
    %v1536 = vld [vmem:[#allocation11 + $0x2c] sm:$0xf]
    %v1537 = vld [vmem:[#allocation11 + $0x30] sm:$0xff]
    %v1538 = vld [vmem:[#allocation11 + $0x38] sm:$0xf]
    %v1539 = vld [vmem:[#allocation11 + $0x3c] sm:$0xff]
    %v1540 = vld [vmem:[#allocation11 + $0x44] sm:$0xf]
    %v1541 = vld [vmem:[#allocation11 + $0x48] sm:$0xff]
    %v1542 = vld [vmem:[#allocation11 + $0x50] sm:$0xf]
    %v1543 = vld [vmem:[#allocation11 + $0x54] sm:$0xff]
    %v1544 = vld [vmem:[#allocation11 + $0x5c] sm:$0xf]
    %v1545 = vld [vmem:[#allocation11 + $0x60] sm:$0xff]
    %v1546 = vld [vmem:[#allocation11 + $0x68] sm:$0xf]
    %v1547 = vld [vmem:[#allocation11 + $0x6c] sm:$0xff]
    %v1548 = vld [vmem:[#allocation11 + $0x74] sm:$0xf]
    %v1549 = vld [vmem:[#allocation11 + $0x78] sm:$0xff]
    %v1550 = vld [vmem:[#allocation11 + $0x80] sm:$0xf]
    %v1551 = vld [vmem:[#allocation11 + $0x84] sm:$0xff]
    %v1552 = vld [vmem:[#allocation11 + $0x8c] sm:$0xf]
    %v1553 = vld [vmem:[#allocation11 + $0x90] sm:$0xff]
    %v1554 = vld [vmem:[#allocation11 + $0x98] sm:$0xf]
    %v1555 = vld [vmem:[#allocation11 + $0x9c] sm:$0xff]
    %v1556 = vld [vmem:[#allocation11 + $0xa4] sm:$0xf]
    %v1557 = vld [vmem:[#allocation11 + $0xa8] sm:$0xff]
    %v1558 = vld [vmem:[#allocation11 + $0xb0] sm:$0xf]
    %v1559 = vld [vmem:[#allocation11 + $0xb4] sm:$0xff]
    %v1560 = vld [vmem:[#allocation11 + $0xbc] sm:$0xf]
    %v1593 = vunpack.c.l.b16 %v1529
    %v1594 = vunpack.c.h.b16 %v1529
    %v1595 = vunpack.c.l.b16 %v1530
    %v1596 = vunpack.c.l.b16 %v1531
    %v1597 = vunpack.c.h.b16 %v1531
    %v1598 = vunpack.c.l.b16 %v1532
    %v1599 = vunpack.c.l.b16 %v1533
    %v1600 = vunpack.c.h.b16 %v1533
    %v1601 = vunpack.c.l.b16 %v1534
    %v1602 = vunpack.c.l.b16 %v1535
    %v1603 = vunpack.c.h.b16 %v1535
    %v1604 = vunpack.c.l.b16 %v1536
    %v1605 = vunpack.c.l.b16 %v1537
    %v1606 = vunpack.c.h.b16 %v1537
    %v1607 = vunpack.c.l.b16 %v1538
    %v1608 = vunpack.c.l.b16 %v1539
    %v1609 = vunpack.c.h.b16 %v1539
    %v1610 = vunpack.c.l.b16 %v1540
    %v1611 = vunpack.c.l.b16 %v1541
    %v1612 = vunpack.c.h.b16 %v1541
    %v1613 = vunpack.c.l.b16 %v1542
    %v1614 = vunpack.c.l.b16 %v1543
    %v1615 = vunpack.c.h.b16 %v1543
    %v1616 = vunpack.c.l.b16 %v1544
    %v1617 = vunpack.c.l.b16 %v1545
    %v1618 = vunpack.c.h.b16 %v1545
    %v1619 = vunpack.c.l.b16 %v1546
    %v1620 = vunpack.c.l.b16 %v1547
    %v1621 = vunpack.c.h.b16 %v1547
    %v1622 = vunpack.c.l.b16 %v1548
    %v1623 = vunpack.c.l.b16 %v1549
    %v1624 = vunpack.c.h.b16 %v1549
    %v1625 = vunpack.c.l.b16 %v1550
    %v1626 = vunpack.c.l.b16 %v1551
    %v1627 = vunpack.c.h.b16 %v1551
    %v1628 = vunpack.c.l.b16 %v1552
    %v1629 = vunpack.c.l.b16 %v1553
    %v1630 = vunpack.c.h.b16 %v1553
    %v1631 = vunpack.c.l.b16 %v1554
    %v1632 = vunpack.c.l.b16 %v1555
    %v1633 = vunpack.c.h.b16 %v1555
    %v1634 = vunpack.c.l.b16 %v1556
    %v1635 = vunpack.c.l.b16 %v1557
    %v1636 = vunpack.c.h.b16 %v1557
    %v1637 = vunpack.c.l.b16 %v1558
    %v1638 = vunpack.c.l.b16 %v1559
    %v1639 = vunpack.c.h.b16 %v1559
    %v1640 = vunpack.c.l.b16 %v1560
    %v1641 = vpack.c.b16 %v1596, %v1593
    %v1642 = vpack.c.b16 %v1597, %v1594
    %v1643 = vpack.c.b16 %v1598, %v1595
    %v1644 = vpack.c.b16 %v1602, %v1599
    %v1645 = vpack.c.b16 %v1603, %v1600
    %v1646 = vpack.c.b16 %v1604, %v1601
    %v1647 = vpack.c.b16 %v1608, %v1605
    %v1648 = vpack.c.b16 %v1609, %v1606
    %v1649 = vpack.c.b16 %v1610, %v1607
    %v1650 = vpack.c.b16 %v1614, %v1611
    %v1651 = vpack.c.b16 %v1615, %v1612
    %v1652 = vpack.c.b16 %v1616, %v1613
    %v1653 = vpack.c.b16 %v1620, %v1617
    %v1654 = vpack.c.b16 %v1621, %v1618
    %v1655 = vpack.c.b16 %v1622, %v1619
    %v1656 = vpack.c.b16 %v1626, %v1623
    %v1657 = vpack.c.b16 %v1627, %v1624
    %v1658 = vpack.c.b16 %v1628, %v1625
    %v1659 = vpack.c.b16 %v1632, %v1629
    %v1660 = vpack.c.b16 %v1633, %v1630
    %v1661 = vpack.c.b16 %v1634, %v1631
    %v1662 = vpack.c.b16 %v1638, %v1635
    %v1663 = vpack.c.b16 %v1639, %v1636
    %v1664 = vpack.c.b16 %v1640, %v1637
    %1689 = vmatprep.subr.bf16.mxu0 %v1663
    %1690 = vmatpush1.bf16.msra.mxu0 %v1662
    %1691 = vmatprep.subr.bf16.mxu0 %v1660
    %1692 = vmatpush1.bf16.msra.mxu0 %v1659
    %1693 = vmatprep.subr.bf16.mxu0 %v1657
    %1694 = vmatpush1.bf16.msra.mxu0 %v1656
    %1695 = vmatprep.subr.bf16.mxu0 %v1654
    %1696 = vmatpush1.bf16.msra.mxu0 %v1653
    %1697 = vmatprep.subr.bf16.mxu0 %v1651
    %1698 = vmatpush1.bf16.msra.mxu0 %v1650
    %1699 = vmatprep.subr.bf16.mxu0 %v1648
    %1700 = vmatpush1.bf16.msra.mxu0 %v1647
    %1701 = vmatprep.subr.bf16.mxu0 %v1645
    %1702 = vmatpush1.bf16.msra.mxu0 %v1644
    %1703 = vmatprep.subr.bf16.mxu0 %v1642
    %1704 = vmatpush1.bf16.msra.mxu0 %v1641
    %1705 = vmatprep.subr.bf16.mxu0 0
    %1706 = vmatpush2.bf16.msra.mxu0 0
    %1707 = vmatprep.subr.bf16.mxu0 0
    %1708 = vmatpush2.bf16.msra.mxu0 0
    %1709 = vmatprep.subr.bf16.mxu0 0
    %1710 = vmatpush2.bf16.msra.mxu0 0
    %1711 = vmatprep.subr.bf16.mxu0 0
    %1712 = vmatpush2.bf16.msra.mxu0 0
    %1713 = vmatprep.subr.bf16.mxu0 0
    %1714 = vmatpush2.bf16.msra.mxu0 0
    %1715 = vmatprep.subr.bf16.mxu0 0
    %1716 = vmatpush2.bf16.msra.mxu0 0
    %1717 = vmatprep.subr.bf16.mxu0 0
    %1718 = vmatpush2.bf16.msra.mxu0 0
    %1719 = vmatprep.subr.bf16.mxu0 0
    %1720 = vmatpush2.bf16.msra.mxu0 0
    %1721 = vmatprep.mubr.bf16.mxu0 0
    %1722 = vmatmul.mubr.bf16.gmra.mxu0 %v1528
    %v1723 = vpop.f32.mrf.mxu0
    %v1724 = vadd.f32 0.0, %v1723
    %v1725 = vpop.f32.mrf.mxu0
    %v1726 = vadd.f32 0.0, %v1725
    %v1727 = vpop.f32.mrf.mxu0
    %v1728 = vpop.f32.mrf.mxu0
    %1729 = vdwg.mxu0
    %1730 = vmatprep.subr.bf16.mxu0 0
    %1731 = vmatpush1.bf16.msra.mxu0 %v1664
    %1732 = vmatprep.subr.bf16.mxu0 0
    %1733 = vmatpush1.bf16.msra.mxu0 %v1661
    %1734 = vmatprep.subr.bf16.mxu0 0
    %1735 = vmatpush1.bf16.msra.mxu0 %v1658
    %1736 = vmatprep.subr.bf16.mxu0 0
    %1737 = vmatpush1.bf16.msra.mxu0 %v1655
    %1738 = vmatprep.subr.bf16.mxu0 0
    %1739 = vmatpush1.bf16.msra.mxu0 %v1652
    %1740 = vmatprep.subr.bf16.mxu0 0
    %1741 = vmatpush1.bf16.msra.mxu0 %v1649
    %1742 = vmatprep.subr.bf16.mxu0 0
    %1743 = vmatpush1.bf16.msra.mxu0 %v1646
    %1744 = vmatprep.subr.bf16.mxu0 0
    %1745 = vmatpush1.bf16.msra.mxu0 %v1643
    %1746 = vmatprep.subr.bf16.mxu0 0
    %1747 = vmatpush2.bf16.msra.mxu0 0
    %1748 = vmatprep.subr.bf16.mxu0 0
    %1749 = vmatpush2.bf16.msra.mxu0 0
    %1750 = vmatprep.subr.bf16.mxu0 0
    %1751 = vmatpush2.bf16.msra.mxu0 0
    %1752 = vmatprep.subr.bf16.mxu0 0
    %1753 = vmatpush2.bf16.msra.mxu0 0
    %1754 = vmatprep.subr.bf16.mxu0 0
    %1755 = vmatpush2.bf16.msra.mxu0 0
    %1756 = vmatprep.subr.bf16.mxu0 0
    %1757 = vmatpush2.bf16.msra.mxu0 0
    %1758 = vmatprep.subr.bf16.mxu0 0
    %1759 = vmatpush2.bf16.msra.mxu0 0
    %1760 = vmatprep.subr.bf16.mxu0 0
    %1761 = vmatpush2.bf16.msra.mxu0 0
    %1762 = vmatprep.mubr.bf16.mxu0 0
    %1763 = vmatmul.mubr.bf16.gmra.mxu0 %v1528
    %v1764 = vpop.f32.mrf.mxu0
    %v1765 = vadd.f32 0.0, %v1764
    %v1766 = vpop.f32.mrf.mxu0
    %v1767 = vpop.f32.mrf.mxu0
    %v1768 = vpop.f32.mrf.mxu0
    %1769 = vdwg.mxu0
    %v1770 = vrot.slane %v1724, 4
    %v1771 = vadd.f32 %v1724, %v1770
    %v1772 = vrot.slane %v1771, 2
    %v1773 = vadd.f32 %v1771, %v1772
    %v1774 = vrot.slane %v1773, 1
    %v1775 = vadd.f32 %v1773, %v1774
    %v1776 = vrot.slane %v1726, 4
    %v1777 = vadd.f32 %v1726, %v1776
    %v1778 = vrot.slane %v1777, 2
    %v1779 = vadd.f32 %v1777, %v1778
    %v1780 = vrot.slane %v1779, 1
    %v1781 = vadd.f32 %v1779, %v1780
    %v1782 = vrot.slane %v1765, 4
    %v1783 = vadd.f32 %v1765, %v1782
    %v1784 = vrot.slane %v1783, 2
    %v1785 = vadd.f32 %v1783, %v1784
    %v1786 = vrot.slane %v1785, 1
    %v1787 = vadd.f32 %v1785, %v1786
    %v1788 = vmul.f32 %v1775, %v828
    %v1789 = vmul.f32 %v1781, %v828
    %v1790 = vmul.f32 %v1787, %v828
    %v1791 = vmul.f32 %v1724, %v1724
    %v1792 = vmul.f32 %v1726, %v1726
    %v1793 = vmul.f32 %v1765, %v1765
    %v1794 = vrot.slane %v1791, 4
    %v1795 = vadd.f32 %v1791, %v1794
    %v1796 = vrot.slane %v1795, 2
    %v1797 = vadd.f32 %v1795, %v1796
    %v1798 = vrot.slane %v1797, 1
    %v1799 = vadd.f32 %v1797, %v1798
    %v1800 = vrot.slane %v1792, 4
    %v1801 = vadd.f32 %v1792, %v1800
    %v1802 = vrot.slane %v1801, 2
    %v1803 = vadd.f32 %v1801, %v1802
    %v1804 = vrot.slane %v1803, 1
    %v1805 = vadd.f32 %v1803, %v1804
    %v1806 = vrot.slane %v1793, 4
    %v1807 = vadd.f32 %v1793, %v1806
    %v1808 = vrot.slane %v1807, 2
    %v1809 = vadd.f32 %v1807, %v1808
    %v1810 = vrot.slane %v1809, 1
    %v1811 = vadd.f32 %v1809, %v1810
    %v1812 = vmul.f32 %v1799, %v828
    %v1813 = vmul.f32 %v1805, %v828
    %v1814 = vmul.f32 %v1811, %v828
    %v1815 = vmul.f32 %v1788, %v1788
    %v1816 = vmul.f32 %v1789, %v1789
    %v1817 = vmul.f32 %v1790, %v1790
    %v1818 = vsub.f32 %v1812, %v1815
    %v1819 = vsub.f32 %v1813, %v1816
    %v1820 = vsub.f32 %v1814, %v1817
    %v1821 = vmax.f32 %v1818, 0.0
    %v1822 = vmax.f32 %v1819, 0.0
    %v1823 = vmax.f32 %v1820, 0.0
    %v1824 = vadd.f32 %v1821, 1e-05
    %v1825 = vadd.f32 %v1822, 1e-05
    %v1826 = vadd.f32 %v1823, 1e-05
    %v1827 = vrsqrt.pop %v1824
    %v1828 = vrsqrt.pop %v1825
    %v1829 = vrsqrt.pop %v1826
    %v1830 = vld [vmem:[#allocation14 + $0xb] sm:$0x7]
    %v1832 = vlaneseq
    %v1833 = vshrl.u32 %v1832, 7
    %v1834 = vsub.s32 0, %v1833
    %v1835 = vrot.slane %v1830, %v1834
    %v1836 = vlaneseq
    %v1837 = vshrl.u32 %v1836, 7
    %v1838 = vsub.s32 1, %v1837
    %v1839 = vrot.slane %v1830, %v1838
    %v1840 = vlaneseq
    %v1841 = vshrl.u32 %v1840, 7
    %v1842 = vsub.s32 2, %v1841
    %v1843 = vrot.slane %v1830, %v1842
    %v1847 = vmul.f32 %v1827, %v1835
    %v1848 = vmul.f32 %v1828, %v1839
    %v1849 = vmul.f32 %v1829, %v1843
    %v1850 = vld [vmem:[#allocation14 + $0xe] sm:$0x7]
    %v1851 = vmul.f32 %v1788, %v1847
    %v1852 = vmul.f32 %v1789, %v1848
    %v1853 = vmul.f32 %v1790, %v1849
    %v1857 = vcombine.low %v1851, %v1852
    %v1859 = vunpack.c.l.s4 1966171168
    %v1860 = vunpack.c.0.s8 %v1859
    %v1861 = vlaneseq
    %v1862 = vshrl.u32 %v1861, 7
    %v1863 = vsub.s32 %v1860, %v1862
    %v1864 = vrot.slane %v1857, %v1863
    %v1866 = vunpack.c.l.s4 1966171168
    %v1867 = vunpack.c.0.s8 %v1866
    %v1868 = vlaneseq
    %v1869 = vshrl.u32 %v1868, 7
    %v1870 = vsub.s32 %v1867, %v1869
    %v1871 = vrot.slane %v1853, %v1870
    %v1872 = vcombine.low %v1864, %v1871
    %v1874 = vunpack.c.l.s4 1966171168
    %v1875 = vunpack.c.0.s8 %v1874
    %v1876 = vlaneseq
    %v1877 = vshrl.u32 %v1876, 7
    %v1878 = vsub.s32 %v1875, %v1877
    %v1879 = vrot.slane %v1872, %v1878
    %v1881 = vsub.f32 %v1850, %v1879
    %v1882 = vlaneseq
    %v1883 = vshrl.u32 %v1882, 7
    %v1884 = vsub.s32 0, %v1883
    %v1885 = vrot.slane %v1847, %v1884
    %v1886 = vlaneseq
    %v1887 = vshrl.u32 %v1886, 7
    %v1888 = vsub.s32 0, %v1887
    %v1889 = vrot.slane %v1848, %v1888
    %v1890 = vlaneseq
    %v1891 = vshrl.u32 %v1890, 7
    %v1892 = vsub.s32 0, %v1891
    %v1893 = vrot.slane %v1849, %v1892
    %v1894 = vmul.f32 %v1724, %v1885
    %v1895 = vmul.f32 %v1726, %v1889
    %v1896 = vmul.f32 %v1765, %v1893
    %v1898 = vlaneseq
    %v1899 = vshrl.u32 %v1898, 7
    %v1900 = vsub.s32 0, %v1899
    %v1901 = vrot.slane %v1881, %v1900
    %v1902 = vlaneseq
    %v1903 = vshrl.u32 %v1902, 7
    %v1904 = vsub.s32 1, %v1903
    %v1905 = vrot.slane %v1881, %v1904
    %v1906 = vlaneseq
    %v1907 = vshrl.u32 %v1906, 7
    %v1908 = vsub.s32 2, %v1907
    %v1909 = vrot.slane %v1881, %v1908
    %v1913 = vadd.f32 %v1894, %v1901
    %v1914 = vadd.f32 %v1895, %v1905
    %v1915 = vadd.f32 %v1896, %v1909
    %v1916 = vmax.f32 %v1913, 0.0
    %v1917 = vmax.f32 %v1914, 0.0
    %v1918 = vmax.f32 %v1915, 0.0
    %v1919 = vpack.c.bf16 %v1916, %v1916
    %v1920 = vpack.c.bf16 %v1917, %v1917
    %v1921 = vpack.c.bf16 %v1918, %v1918
    %v1922 = vld [vmem:[#allocation14 + $0x11] sm:$0xf]
    %v1923 = vld [vmem:[#allocation13] sm:$0xff]
    %v1924 = vld [vmem:[#allocation13 + $0x8] sm:$0xff]
    %v1925 = vld [vmem:[#allocation13 + $0x10] sm:$0xff]
    %v1926 = vld [vmem:[#allocation13 + $0x18] sm:$0xff]
    %v1927 = vld [vmem:[#allocation13 + $0x20] sm:$0xff]
    %v1928 = vld [vmem:[#allocation13 + $0x28] sm:$0xff]
    %v1929 = vld [vmem:[#allocation13 + $0x30] sm:$0xff]
    %v1930 = vld [vmem:[#allocation13 + $0x38] sm:$0xff]
    %v1931 = vld [vmem:[#allocation13 + $0x40] sm:$0xff]
    %v1932 = vld [vmem:[#allocation13 + $0x48] sm:$0xff]
    %v1933 = vld [vmem:[#allocation13 + $0x50] sm:$0xff]
    %v1934 = vld [vmem:[#allocation13 + $0x58] sm:$0xff]
    %v1935 = vld [vmem:[#allocation13 + $0x60] sm:$0xff]
    %v1936 = vld [vmem:[#allocation13 + $0x68] sm:$0xff]
    %v1937 = vld [vmem:[#allocation13 + $0x70] sm:$0xff]
    %v1938 = vld [vmem:[#allocation13 + $0x78] sm:$0xff]
    %v1939 = vld [vmem:[#allocation13 + $0x80] sm:$0xff]
    %v1940 = vld [vmem:[#allocation13 + $0x88] sm:$0xff]
    %v1941 = vld [vmem:[#allocation13 + $0x90] sm:$0xff]
    %v1942 = vld [vmem:[#allocation13 + $0x98] sm:$0xff]
    %v1943 = vld [vmem:[#allocation13 + $0xa0] sm:$0xff]
    %v1944 = vld [vmem:[#allocation13 + $0xa8] sm:$0xff]
    %v1945 = vld [vmem:[#allocation13 + $0xb0] sm:$0xff]
    %v1946 = vld [vmem:[#allocation13 + $0xb8] sm:$0xff]
    %v1947 = vld [vmem:[#allocation13 + $0xc0] sm:$0xff]
    %v1948 = vld [vmem:[#allocation13 + $0xc8] sm:$0xff]
    %v1949 = vld [vmem:[#allocation13 + $0xd0] sm:$0xff]
    %v1950 = vld [vmem:[#allocation13 + $0xd8] sm:$0xff]
    %v1951 = vld [vmem:[#allocation13 + $0xe0] sm:$0xff]
    %v1952 = vld [vmem:[#allocation13 + $0xe8] sm:$0xff]
    %v1953 = vld [vmem:[#allocation13 + $0xf0] sm:$0xff]
    %v1954 = vld [vmem:[#allocation13 + $0xf8] sm:$0xff]
    %v1955 = vld [vmem:[#allocation13 + $0x100] sm:$0xff]
    %v1956 = vld [vmem:[#allocation13 + $0x108] sm:$0xff]
    %v1957 = vld [vmem:[#allocation13 + $0x110] sm:$0xff]
    %v1958 = vld [vmem:[#allocation13 + $0x118] sm:$0xff]
    %v1959 = vld [vmem:[#allocation13 + $0x120] sm:$0xff]
    %v1960 = vld [vmem:[#allocation13 + $0x128] sm:$0xff]
    %v1961 = vld [vmem:[#allocation13 + $0x130] sm:$0xff]
    %v1962 = vld [vmem:[#allocation13 + $0x138] sm:$0xff]
    %v1963 = vld [vmem:[#allocation13 + $0x140] sm:$0xff]
    %v1964 = vld [vmem:[#allocation13 + $0x148] sm:$0xff]
    %v1965 = vld [vmem:[#allocation13 + $0x150] sm:$0xff]
    %v1966 = vld [vmem:[#allocation13 + $0x158] sm:$0xff]
    %v1967 = vld [vmem:[#allocation13 + $0x160] sm:$0xff]
    %v1968 = vld [vmem:[#allocation13 + $0x168] sm:$0xff]
    %v1969 = vld [vmem:[#allocation13 + $0x170] sm:$0xff]
    %v1970 = vld [vmem:[#allocation13 + $0x178] sm:$0xff]
    %v1971 = vld [vmem:[#allocation13 + $0x180] sm:$0xff]
    %v1972 = vld [vmem:[#allocation13 + $0x188] sm:$0xff]
    %v1973 = vld [vmem:[#allocation13 + $0x190] sm:$0xff]
    %v1974 = vld [vmem:[#allocation13 + $0x198] sm:$0xff]
    %v1975 = vld [vmem:[#allocation13 + $0x1a0] sm:$0xff]
    %v1976 = vld [vmem:[#allocation13 + $0x1a8] sm:$0xff]
    %v1977 = vld [vmem:[#allocation13 + $0x1b0] sm:$0xff]
    %v1978 = vld [vmem:[#allocation13 + $0x1b8] sm:$0xff]
    %v1979 = vld [vmem:[#allocation13 + $0x1c0] sm:$0xff]
    %v1980 = vld [vmem:[#allocation13 + $0x1c8] sm:$0xff]
    %v1981 = vld [vmem:[#allocation13 + $0x1d0] sm:$0xff]
    %v1982 = vld [vmem:[#allocation13 + $0x1d8] sm:$0xff]
    %v1983 = vld [vmem:[#allocation13 + $0x1e0] sm:$0xff]
    %v1984 = vld [vmem:[#allocation13 + $0x1e8] sm:$0xff]
    %v1985 = vld [vmem:[#allocation13 + $0x1f0] sm:$0xff]
    %v1986 = vld [vmem:[#allocation13 + $0x1f8] sm:$0xff]
    %v1987 = vld [vmem:[#allocation13 + $0x200] sm:$0xff]
    %v1988 = vld [vmem:[#allocation13 + $0x208] sm:$0xff]
    %v1989 = vld [vmem:[#allocation13 + $0x210] sm:$0xff]
    %v1990 = vld [vmem:[#allocation13 + $0x218] sm:$0xff]
    %v1991 = vld [vmem:[#allocation13 + $0x220] sm:$0xff]
    %v1992 = vld [vmem:[#allocation13 + $0x228] sm:$0xff]
    %v1993 = vld [vmem:[#allocation13 + $0x230] sm:$0xff]
    %v1994 = vld [vmem:[#allocation13 + $0x238] sm:$0xff]
    %v1995 = vld [vmem:[#allocation13 + $0x240] sm:$0xff]
    %v1996 = vld [vmem:[#allocation13 + $0x248] sm:$0xff]
    %v1997 = vld [vmem:[#allocation13 + $0x250] sm:$0xff]
    %v1998 = vld [vmem:[#allocation13 + $0x258] sm:$0xff]
    %v1999 = vld [vmem:[#allocation13 + $0x260] sm:$0xff]
    %v2000 = vld [vmem:[#allocation13 + $0x268] sm:$0xff]
    %v2001 = vld [vmem:[#allocation13 + $0x270] sm:$0xff]
    %v2002 = vld [vmem:[#allocation13 + $0x278] sm:$0xff]
    %v2003 = vld [vmem:[#allocation13 + $0x280] sm:$0xff]
    %v2004 = vld [vmem:[#allocation13 + $0x288] sm:$0xff]
    %v2005 = vld [vmem:[#allocation13 + $0x290] sm:$0xff]
    %v2006 = vld [vmem:[#allocation13 + $0x298] sm:$0xff]
    %v2007 = vld [vmem:[#allocation13 + $0x2a0] sm:$0xff]
    %v2008 = vld [vmem:[#allocation13 + $0x2a8] sm:$0xff]
    %v2009 = vld [vmem:[#allocation13 + $0x2b0] sm:$0xff]
    %v2010 = vld [vmem:[#allocation13 + $0x2b8] sm:$0xff]
    %v2011 = vld [vmem:[#allocation13 + $0x2c0] sm:$0xff]
    %v2012 = vld [vmem:[#allocation13 + $0x2c8] sm:$0xff]
    %v2013 = vld [vmem:[#allocation13 + $0x2d0] sm:$0xff]
    %v2014 = vld [vmem:[#allocation13 + $0x2d8] sm:$0xff]
    %v2015 = vld [vmem:[#allocation13 + $0x2e0] sm:$0xff]
    %v2016 = vld [vmem:[#allocation13 + $0x2e8] sm:$0xff]
    %v2017 = vld [vmem:[#allocation13 + $0x2f0] sm:$0xff]
    %v2018 = vld [vmem:[#allocation13 + $0x2f8] sm:$0xff]
    %v2020 = vlaneseq
    %v2021 = vshrl.u32 %v2020, 7
    %v2022 = vsub.s32 0, %v2021
    %v2023 = vrot.slane %v1922, %v2022
    %v2024 = vlaneseq
    %v2025 = vshrl.u32 %v2024, 7
    %v2026 = vsub.s32 1, %v2025
    %v2027 = vrot.slane %v1922, %v2026
    %v2028 = vlaneseq
    %v2029 = vshrl.u32 %v2028, 7
    %v2030 = vsub.s32 2, %v2029
    %v2031 = vrot.slane %v1922, %v2030
    %v2032 = vlaneseq
    %v2033 = vshrl.u32 %v2032, 7
    %v2034 = vsub.s32 3, %v2033
    %v2035 = vrot.slane %v1922, %v2034
    %v2136 = vunpack.c.l.b16 %v1923
    %v2137 = vunpack.c.h.b16 %v1923
    %v2138 = vunpack.c.l.b16 %v1924
    %v2139 = vunpack.c.h.b16 %v1924
    %v2140 = vunpack.c.l.b16 %v1925
    %v2141 = vunpack.c.h.b16 %v1925
    %v2142 = vunpack.c.l.b16 %v1926
    %v2143 = vunpack.c.h.b16 %v1926
    %v2144 = vunpack.c.l.b16 %v1927
    %v2145 = vunpack.c.h.b16 %v1927
    %v2146 = vunpack.c.l.b16 %v1928
    %v2147 = vunpack.c.h.b16 %v1928
    %v2148 = vunpack.c.l.b16 %v1929
    %v2149 = vunpack.c.h.b16 %v1929
    %v2150 = vunpack.c.l.b16 %v1930
    %v2151 = vunpack.c.h.b16 %v1930
    %v2152 = vunpack.c.l.b16 %v1931
    %v2153 = vunpack.c.h.b16 %v1931
    %v2154 = vunpack.c.l.b16 %v1932
    %v2155 = vunpack.c.h.b16 %v1932
    %v2156 = vunpack.c.l.b16 %v1933
    %v2157 = vunpack.c.h.b16 %v1933
    %v2158 = vunpack.c.l.b16 %v1934
    %v2159 = vunpack.c.h.b16 %v1934
    %v2160 = vunpack.c.l.b16 %v1935
    %v2161 = vunpack.c.h.b16 %v1935
    %v2162 = vunpack.c.l.b16 %v1936
    %v2163 = vunpack.c.h.b16 %v1936
    %v2164 = vunpack.c.l.b16 %v1937
    %v2165 = vunpack.c.h.b16 %v1937
    %v2166 = vunpack.c.l.b16 %v1938
    %v2167 = vunpack.c.h.b16 %v1938
    %v2168 = vunpack.c.l.b16 %v1939
    %v2169 = vunpack.c.h.b16 %v1939
    %v2170 = vunpack.c.l.b16 %v1940
    %v2171 = vunpack.c.h.b16 %v1940
    %v2172 = vunpack.c.l.b16 %v1941
    %v2173 = vunpack.c.h.b16 %v1941
    %v2174 = vunpack.c.l.b16 %v1942
    %v2175 = vunpack.c.h.b16 %v1942
    %v2176 = vunpack.c.l.b16 %v1943
    %v2177 = vunpack.c.h.b16 %v1943
    %v2178 = vunpack.c.l.b16 %v1944
    %v2179 = vunpack.c.h.b16 %v1944
    %v2180 = vunpack.c.l.b16 %v1945
    %v2181 = vunpack.c.h.b16 %v1945
    %v2182 = vunpack.c.l.b16 %v1946
    %v2183 = vunpack.c.h.b16 %v1946
    %v2184 = vunpack.c.l.b16 %v1947
    %v2185 = vunpack.c.h.b16 %v1947
    %v2186 = vunpack.c.l.b16 %v1948
    %v2187 = vunpack.c.h.b16 %v1948
    %v2188 = vunpack.c.l.b16 %v1949
    %v2189 = vunpack.c.h.b16 %v1949
    %v2190 = vunpack.c.l.b16 %v1950
    %v2191 = vunpack.c.h.b16 %v1950
    %v2192 = vunpack.c.l.b16 %v1951
    %v2193 = vunpack.c.h.b16 %v1951
    %v2194 = vunpack.c.l.b16 %v1952
    %v2195 = vunpack.c.h.b16 %v1952
    %v2196 = vunpack.c.l.b16 %v1953
    %v2197 = vunpack.c.h.b16 %v1953
    %v2198 = vunpack.c.l.b16 %v1954
    %v2199 = vunpack.c.h.b16 %v1954
    %v2200 = vunpack.c.l.b16 %v1955
    %v2201 = vunpack.c.h.b16 %v1955
    %v2202 = vunpack.c.l.b16 %v1956
    %v2203 = vunpack.c.h.b16 %v1956
    %v2204 = vunpack.c.l.b16 %v1957
    %v2205 = vunpack.c.h.b16 %v1957
    %v2206 = vunpack.c.l.b16 %v1958
    %v2207 = vunpack.c.h.b16 %v1958
    %v2208 = vunpack.c.l.b16 %v1959
    %v2209 = vunpack.c.h.b16 %v1959
    %v2210 = vunpack.c.l.b16 %v1960
    %v2211 = vunpack.c.h.b16 %v1960
    %v2212 = vunpack.c.l.b16 %v1961
    %v2213 = vunpack.c.h.b16 %v1961
    %v2214 = vunpack.c.l.b16 %v1962
    %v2215 = vunpack.c.h.b16 %v1962
    %v2216 = vunpack.c.l.b16 %v1963
    %v2217 = vunpack.c.h.b16 %v1963
    %v2218 = vunpack.c.l.b16 %v1964
    %v2219 = vunpack.c.h.b16 %v1964
    %v2220 = vunpack.c.l.b16 %v1965
    %v2221 = vunpack.c.h.b16 %v1965
    %v2222 = vunpack.c.l.b16 %v1966
    %v2223 = vunpack.c.h.b16 %v1966
    %v2224 = vunpack.c.l.b16 %v1967
    %v2225 = vunpack.c.h.b16 %v1967
    %v2226 = vunpack.c.l.b16 %v1968
    %v2227 = vunpack.c.h.b16 %v1968
    %v2228 = vunpack.c.l.b16 %v1969
    %v2229 = vunpack.c.h.b16 %v1969
    %v2230 = vunpack.c.l.b16 %v1970
    %v2231 = vunpack.c.h.b16 %v1970
    %v2232 = vunpack.c.l.b16 %v1971
    %v2233 = vunpack.c.h.b16 %v1971
    %v2234 = vunpack.c.l.b16 %v1972
    %v2235 = vunpack.c.h.b16 %v1972
    %v2236 = vunpack.c.l.b16 %v1973
    %v2237 = vunpack.c.h.b16 %v1973
    %v2238 = vunpack.c.l.b16 %v1974
    %v2239 = vunpack.c.h.b16 %v1974
    %v2240 = vunpack.c.l.b16 %v1975
    %v2241 = vunpack.c.h.b16 %v1975
    %v2242 = vunpack.c.l.b16 %v1976
    %v2243 = vunpack.c.h.b16 %v1976
    %v2244 = vunpack.c.l.b16 %v1977
    %v2245 = vunpack.c.h.b16 %v1977
    %v2246 = vunpack.c.l.b16 %v1978
    %v2247 = vunpack.c.h.b16 %v1978
    %v2248 = vunpack.c.l.b16 %v1979
    %v2249 = vunpack.c.h.b16 %v1979
    %v2250 = vunpack.c.l.b16 %v1980
    %v2251 = vunpack.c.h.b16 %v1980
    %v2252 = vunpack.c.l.b16 %v1981
    %v2253 = vunpack.c.h.b16 %v1981
    %v2254 = vunpack.c.l.b16 %v1982
    %v2255 = vunpack.c.h.b16 %v1982
    %v2256 = vunpack.c.l.b16 %v1983
    %v2257 = vunpack.c.h.b16 %v1983
    %v2258 = vunpack.c.l.b16 %v1984
    %v2259 = vunpack.c.h.b16 %v1984
    %v2260 = vunpack.c.l.b16 %v1985
    %v2261 = vunpack.c.h.b16 %v1985
    %v2262 = vunpack.c.l.b16 %v1986
    %v2263 = vunpack.c.h.b16 %v1986
    %v2264 = vunpack.c.l.b16 %v1987
    %v2265 = vunpack.c.h.b16 %v1987
    %v2266 = vunpack.c.l.b16 %v1988
    %v2267 = vunpack.c.h.b16 %v1988
    %v2268 = vunpack.c.l.b16 %v1989
    %v2269 = vunpack.c.h.b16 %v1989
    %v2270 = vunpack.c.l.b16 %v1990
    %v2271 = vunpack.c.h.b16 %v1990
    %v2272 = vunpack.c.l.b16 %v1991
    %v2273 = vunpack.c.h.b16 %v1991
    %v2274 = vunpack.c.l.b16 %v1992
    %v2275 = vunpack.c.h.b16 %v1992
    %v2276 = vunpack.c.l.b16 %v1993
    %v2277 = vunpack.c.h.b16 %v1993
    %v2278 = vunpack.c.l.b16 %v1994
    %v2279 = vunpack.c.h.b16 %v1994
    %v2280 = vunpack.c.l.b16 %v1995
    %v2281 = vunpack.c.h.b16 %v1995
    %v2282 = vunpack.c.l.b16 %v1996
    %v2283 = vunpack.c.h.b16 %v1996
    %v2284 = vunpack.c.l.b16 %v1997
    %v2285 = vunpack.c.h.b16 %v1997
    %v2286 = vunpack.c.l.b16 %v1998
    %v2287 = vunpack.c.h.b16 %v1998
    %v2288 = vunpack.c.l.b16 %v1999
    %v2289 = vunpack.c.h.b16 %v1999
    %v2290 = vunpack.c.l.b16 %v2000
    %v2291 = vunpack.c.h.b16 %v2000
    %v2292 = vunpack.c.l.b16 %v2001
    %v2293 = vunpack.c.h.b16 %v2001
    %v2294 = vunpack.c.l.b16 %v2002
    %v2295 = vunpack.c.h.b16 %v2002
    %v2296 = vunpack.c.l.b16 %v2003
    %v2297 = vunpack.c.h.b16 %v2003
    %v2298 = vunpack.c.l.b16 %v2004
    %v2299 = vunpack.c.h.b16 %v2004
    %v2300 = vunpack.c.l.b16 %v2005
    %v2301 = vunpack.c.h.b16 %v2005
    %v2302 = vunpack.c.l.b16 %v2006
    %v2303 = vunpack.c.h.b16 %v2006
    %v2304 = vunpack.c.l.b16 %v2007
    %v2305 = vunpack.c.h.b16 %v2007
    %v2306 = vunpack.c.l.b16 %v2008
    %v2307 = vunpack.c.h.b16 %v2008
    %v2308 = vunpack.c.l.b16 %v2009
    %v2309 = vunpack.c.h.b16 %v2009
    %v2310 = vunpack.c.l.b16 %v2010
    %v2311 = vunpack.c.h.b16 %v2010
    %v2312 = vunpack.c.l.b16 %v2011
    %v2313 = vunpack.c.h.b16 %v2011
    %v2314 = vunpack.c.l.b16 %v2012
    %v2315 = vunpack.c.h.b16 %v2012
    %v2316 = vunpack.c.l.b16 %v2013
    %v2317 = vunpack.c.h.b16 %v2013
    %v2318 = vunpack.c.l.b16 %v2014
    %v2319 = vunpack.c.h.b16 %v2014
    %v2320 = vunpack.c.l.b16 %v2015
    %v2321 = vunpack.c.h.b16 %v2015
    %v2322 = vunpack.c.l.b16 %v2016
    %v2323 = vunpack.c.h.b16 %v2016
    %v2324 = vunpack.c.l.b16 %v2017
    %v2325 = vunpack.c.h.b16 %v2017
    %v2326 = vunpack.c.l.b16 %v2018
    %v2327 = vunpack.c.h.b16 %v2018
    %v2328 = vpack.c.b16 %v2140, %v2136
    %v2329 = vpack.c.b16 %v2141, %v2137
    %v2330 = vpack.c.b16 %v2142, %v2138
    %v2331 = vpack.c.b16 %v2143, %v2139
    %v2332 = vpack.c.b16 %v2148, %v2144
    %v2333 = vpack.c.b16 %v2149, %v2145
    %v2334 = vpack.c.b16 %v2150, %v2146
    %v2335 = vpack.c.b16 %v2151, %v2147
    %v2336 = vpack.c.b16 %v2156, %v2152
    %v2337 = vpack.c.b16 %v2157, %v2153
    %v2338 = vpack.c.b16 %v2158, %v2154
    %v2339 = vpack.c.b16 %v2159, %v2155
    %v2340 = vpack.c.b16 %v2164, %v2160
    %v2341 = vpack.c.b16 %v2165, %v2161
    %v2342 = vpack.c.b16 %v2166, %v2162
    %v2343 = vpack.c.b16 %v2167, %v2163
    %v2344 = vpack.c.b16 %v2172, %v2168
    %v2345 = vpack.c.b16 %v2173, %v2169
    %v2346 = vpack.c.b16 %v2174, %v2170
    %v2347 = vpack.c.b16 %v2175, %v2171
    %v2348 = vpack.c.b16 %v2180, %v2176
    %v2349 = vpack.c.b16 %v2181, %v2177
    %v2350 = vpack.c.b16 %v2182, %v2178
    %v2351 = vpack.c.b16 %v2183, %v2179
    %v2352 = vpack.c.b16 %v2188, %v2184
    %v2353 = vpack.c.b16 %v2189, %v2185
    %v2354 = vpack.c.b16 %v2190, %v2186
    %v2355 = vpack.c.b16 %v2191, %v2187
    %v2356 = vpack.c.b16 %v2196, %v2192
    %v2357 = vpack.c.b16 %v2197, %v2193
    %v2358 = vpack.c.b16 %v2198, %v2194
    %v2359 = vpack.c.b16 %v2199, %v2195
    %v2360 = vpack.c.b16 %v2204, %v2200
    %v2361 = vpack.c.b16 %v2205, %v2201
    %v2362 = vpack.c.b16 %v2206, %v2202
    %v2363 = vpack.c.b16 %v2207, %v2203
    %v2364 = vpack.c.b16 %v2212, %v2208
    %v2365 = vpack.c.b16 %v2213, %v2209
    %v2366 = vpack.c.b16 %v2214, %v2210
    %v2367 = vpack.c.b16 %v2215, %v2211
    %v2368 = vpack.c.b16 %v2220, %v2216
    %v2369 = vpack.c.b16 %v2221, %v2217
    %v2370 = vpack.c.b16 %v2222, %v2218
    %v2371 = vpack.c.b16 %v2223, %v2219
    %v2372 = vpack.c.b16 %v2228, %v2224
    %v2373 = vpack.c.b16 %v2229, %v2225
    %v2374 = vpack.c.b16 %v2230, %v2226
    %v2375 = vpack.c.b16 %v2231, %v2227
    %v2376 = vpack.c.b16 %v2236, %v2232
    %v2377 = vpack.c.b16 %v2237, %v2233
    %v2378 = vpack.c.b16 %v2238, %v2234
    %v2379 = vpack.c.b16 %v2239, %v2235
    %v2380 = vpack.c.b16 %v2244, %v2240
    %v2381 = vpack.c.b16 %v2245, %v2241
    %v2382 = vpack.c.b16 %v2246, %v2242
    %v2383 = vpack.c.b16 %v2247, %v2243
    %v2384 = vpack.c.b16 %v2252, %v2248
    %v2385 = vpack.c.b16 %v2253, %v2249
    %v2386 = vpack.c.b16 %v2254, %v2250
    %v2387 = vpack.c.b16 %v2255, %v2251
    %v2388 = vpack.c.b16 %v2260, %v2256
    %v2389 = vpack.c.b16 %v2261, %v2257
    %v2390 = vpack.c.b16 %v2262, %v2258
    %v2391 = vpack.c.b16 %v2263, %v2259
    %v2392 = vpack.c.b16 %v2268, %v2264
    %v2393 = vpack.c.b16 %v2269, %v2265
    %v2394 = vpack.c.b16 %v2270, %v2266
    %v2395 = vpack.c.b16 %v2271, %v2267
    %v2396 = vpack.c.b16 %v2276, %v2272
    %v2397 = vpack.c.b16 %v2277, %v2273
    %v2398 = vpack.c.b16 %v2278, %v2274
    %v2399 = vpack.c.b16 %v2279, %v2275
    %v2400 = vpack.c.b16 %v2284, %v2280
    %v2401 = vpack.c.b16 %v2285, %v2281
    %v2402 = vpack.c.b16 %v2286, %v2282
    %v2403 = vpack.c.b16 %v2287, %v2283
    %v2404 = vpack.c.b16 %v2292, %v2288
    %v2405 = vpack.c.b16 %v2293, %v2289
    %v2406 = vpack.c.b16 %v2294, %v2290
    %v2407 = vpack.c.b16 %v2295, %v2291
    %v2408 = vpack.c.b16 %v2300, %v2296
    %v2409 = vpack.c.b16 %v2301, %v2297
    %v2410 = vpack.c.b16 %v2302, %v2298
    %v2411 = vpack.c.b16 %v2303, %v2299
    %v2412 = vpack.c.b16 %v2308, %v2304
    %v2413 = vpack.c.b16 %v2309, %v2305
    %v2414 = vpack.c.b16 %v2310, %v2306
    %v2415 = vpack.c.b16 %v2311, %v2307
    %v2416 = vpack.c.b16 %v2316, %v2312
    %v2417 = vpack.c.b16 %v2317, %v2313
    %v2418 = vpack.c.b16 %v2318, %v2314
    %v2419 = vpack.c.b16 %v2319, %v2315
    %v2420 = vpack.c.b16 %v2324, %v2320
    %v2421 = vpack.c.b16 %v2325, %v2321
    %v2422 = vpack.c.b16 %v2326, %v2322
    %v2423 = vpack.c.b16 %v2327, %v2323
    %2520 = vmatprep.subr.bf16.mxu0 %v2357
    %2521 = vmatpush1.bf16.msra.mxu0 %v2356
    %2522 = vmatprep.subr.bf16.mxu0 %v2353
    %2523 = vmatpush1.bf16.msra.mxu0 %v2352
    %2524 = vmatprep.subr.bf16.mxu0 %v2349
    %2525 = vmatpush1.bf16.msra.mxu0 %v2348
    %2526 = vmatprep.subr.bf16.mxu0 %v2345
    %2527 = vmatpush1.bf16.msra.mxu0 %v2344
    %2528 = vmatprep.subr.bf16.mxu0 %v2341
    %2529 = vmatpush1.bf16.msra.mxu0 %v2340
    %2530 = vmatprep.subr.bf16.mxu0 %v2337
    %2531 = vmatpush1.bf16.msra.mxu0 %v2336
    %2532 = vmatprep.subr.bf16.mxu0 %v2333
    %2533 = vmatpush1.bf16.msra.mxu0 %v2332
    %2534 = vmatprep.subr.bf16.mxu0 %v2329
    %2535 = vmatpush1.bf16.msra.mxu0 %v2328
    %2536 = vmatprep.subr.bf16.mxu0 %v2389
    %2537 = vmatpush2.bf16.msra.mxu0 %v2388
    %2538 = vmatprep.subr.bf16.mxu0 %v2385
    %2539 = vmatpush2.bf16.msra.mxu0 %v2384
    %2540 = vmatprep.subr.bf16.mxu0 %v2381
    %2541 = vmatpush2.bf16.msra.mxu0 %v2380
    %2542 = vmatprep.subr.bf16.mxu0 %v2377
    %2543 = vmatpush2.bf16.msra.mxu0 %v2376
    %2544 = vmatprep.subr.bf16.mxu0 %v2373
    %2545 = vmatpush2.bf16.msra.mxu0 %v2372
    %2546 = vmatprep.subr.bf16.mxu0 %v2369
    %2547 = vmatpush2.bf16.msra.mxu0 %v2368
    %2548 = vmatprep.subr.bf16.mxu0 %v2365
    %2549 = vmatpush2.bf16.msra.mxu0 %v2364
    %2550 = vmatprep.subr.bf16.mxu0 %v2361
    %2551 = vmatpush2.bf16.msra.mxu0 %v2360
    %2552 = vmatprep.mubr.bf16.mxu0 %v1920
    %2553 = vmatmul.mubr.bf16.gmra.mxu0 %v1919
    %v2554 = vpop.f32.mrf.mxu0
    %v2555 = vadd.f32 %v2023, %v2554
    %v2556 = vpop.f32.mrf.mxu0
    %v2557 = vadd.f32 %v2027, %v2556
    %v2558 = vpop.f32.mrf.mxu0
    %v2559 = vpop.f32.mrf.mxu0
    %2560 = vdwg.mxu0
    %2561 = vmatprep.subr.bf16.mxu0 %v2421
    %2562 = vmatpush1.bf16.msra.mxu0 %v2420
    %2563 = vmatprep.subr.bf16.mxu0 %v2417
    %2564 = vmatpush1.bf16.msra.mxu0 %v2416
    %2565 = vmatprep.subr.bf16.mxu0 %v2413
    %2566 = vmatpush1.bf16.msra.mxu0 %v2412
    %2567 = vmatprep.subr.bf16.mxu0 %v2409
    %2568 = vmatpush1.bf16.msra.mxu0 %v2408
    %2569 = vmatprep.subr.bf16.mxu0 %v2405
    %2570 = vmatpush1.bf16.msra.mxu0 %v2404
    %2571 = vmatprep.subr.bf16.mxu0 %v2401
    %2572 = vmatpush1.bf16.msra.mxu0 %v2400
    %2573 = vmatprep.subr.bf16.mxu0 %v2397
    %2574 = vmatpush1.bf16.msra.mxu0 %v2396
    %2575 = vmatprep.subr.bf16.mxu0 %v2393
    %2576 = vmatpush1.bf16.msra.mxu0 %v2392
    %2577 = vmatprep.subr.bf16.mxu0 0
    %2578 = vmatpush2.bf16.msra.mxu0 0
    %2579 = vmatprep.subr.bf16.mxu0 0
    %2580 = vmatpush2.bf16.msra.mxu0 0
    %2581 = vmatprep.subr.bf16.mxu0 0
    %2582 = vmatpush2.bf16.msra.mxu0 0
    %2583 = vmatprep.subr.bf16.mxu0 0
    %2584 = vmatpush2.bf16.msra.mxu0 0
    %2585 = vmatprep.subr.bf16.mxu0 0
    %2586 = vmatpush2.bf16.msra.mxu0 0
    %2587 = vmatprep.subr.bf16.mxu0 0
    %2588 = vmatpush2.bf16.msra.mxu0 0
    %2589 = vmatprep.subr.bf16.mxu0 0
    %2590 = vmatpush2.bf16.msra.mxu0 0
    %2591 = vmatprep.subr.bf16.mxu0 0
    %2592 = vmatpush2.bf16.msra.mxu0 0
    %2593 = vmatprep.mubr.bf16.mxu0 0
    %2594 = vmatmul.mubr.bf16.gmra.mxu0 %v1921
    %v2595 = vpop.f32.mrf.mxu0
    %v2596 = vadd.f32 %v2555, %v2595
    %v2597 = vpop.f32.mrf.mxu0
    %v2598 = vadd.f32 %v2557, %v2597
    %v2599 = vpop.f32.mrf.mxu0
    %v2600 = vpop.f32.mrf.mxu0
    %2601 = vdwg.mxu0
    %2602 = vmatprep.subr.bf16.mxu0 %v2359
    %2603 = vmatpush1.bf16.msra.mxu0 %v2358
    %2604 = vmatprep.subr.bf16.mxu0 %v2355
    %2605 = vmatpush1.bf16.msra.mxu0 %v2354
    %2606 = vmatprep.subr.bf16.mxu0 %v2351
    %2607 = vmatpush1.bf16.msra.mxu0 %v2350
    %2608 = vmatprep.subr.bf16.mxu0 %v2347
    %2609 = vmatpush1.bf16.msra.mxu0 %v2346
    %2610 = vmatprep.subr.bf16.mxu0 %v2343
    %2611 = vmatpush1.bf16.msra.mxu0 %v2342
    %2612 = vmatprep.subr.bf16.mxu0 %v2339
    %2613 = vmatpush1.bf16.msra.mxu0 %v2338
    %2614 = vmatprep.subr.bf16.mxu0 %v2335
    %2615 = vmatpush1.bf16.msra.mxu0 %v2334
    %2616 = vmatprep.subr.bf16.mxu0 %v2331
    %2617 = vmatpush1.bf16.msra.mxu0 %v2330
    %2618 = vmatprep.subr.bf16.mxu0 %v2391
    %2619 = vmatpush2.bf16.msra.mxu0 %v2390
    %2620 = vmatprep.subr.bf16.mxu0 %v2387
    %2621 = vmatpush2.bf16.msra.mxu0 %v2386
    %2622 = vmatprep.subr.bf16.mxu0 %v2383
    %2623 = vmatpush2.bf16.msra.mxu0 %v2382
    %2624 = vmatprep.subr.bf16.mxu0 %v2379
    %2625 = vmatpush2.bf16.msra.mxu0 %v2378
    %2626 = vmatprep.subr.bf16.mxu0 %v2375
    %2627 = vmatpush2.bf16.msra.mxu0 %v2374
    %2628 = vmatprep.subr.bf16.mxu0 %v2371
    %2629 = vmatpush2.bf16.msra.mxu0 %v2370
    %2630 = vmatprep.subr.bf16.mxu0 %v2367
    %2631 = vmatpush2.bf16.msra.mxu0 %v2366
    %2632 = vmatprep.subr.bf16.mxu0 %v2363
    %2633 = vmatpush2.bf16.msra.mxu0 %v2362
    %2634 = vmatprep.mubr.bf16.mxu0 %v1920
    %2635 = vmatmul.mubr.bf16.gmra.mxu0 %v1919
    %v2636 = vpop.f32.mrf.mxu0
    %v2637 = vadd.f32 %v2031, %v2636
    %v2638 = vpop.f32.mrf.mxu0
    %v2639 = vadd.f32 %v2035, %v2638
    %v2640 = vpop.f32.mrf.mxu0
    %v2641 = vpop.f32.mrf.mxu0
    %2642 = vdwg.mxu0
    %2643 = vmatprep.subr.bf16.mxu0 %v2423
    %2644 = vmatpush1.bf16.msra.mxu0 %v2422
    %2645 = vmatprep.subr.bf16.mxu0 %v2419
    %2646 = vmatpush1.bf16.msra.mxu0 %v2418
    %2647 = vmatprep.subr.bf16.mxu0 %v2415
    %2648 = vmatpush1.bf16.msra.mxu0 %v2414
    %2649 = vmatprep.subr.bf16.mxu0 %v2411
    %2650 = vmatpush1.bf16.msra.mxu0 %v2410
    %2651 = vmatprep.subr.bf16.mxu0 %v2407
    %2652 = vmatpush1.bf16.msra.mxu0 %v2406
    %2653 = vmatprep.subr.bf16.mxu0 %v2403
    %2654 = vmatpush1.bf16.msra.mxu0 %v2402
    %2655 = vmatprep.subr.bf16.mxu0 %v2399
    %2656 = vmatpush1.bf16.msra.mxu0 %v2398
    %2657 = vmatprep.subr.bf16.mxu0 %v2395
    %2658 = vmatpush1.bf16.msra.mxu0 %v2394
    %2659 = vmatprep.subr.bf16.mxu0 0
    %2660 = vmatpush2.bf16.msra.mxu0 0
    %2661 = vmatprep.subr.bf16.mxu0 0
    %2662 = vmatpush2.bf16.msra.mxu0 0
    %2663 = vmatprep.subr.bf16.mxu0 0
    %2664 = vmatpush2.bf16.msra.mxu0 0
    %2665 = vmatprep.subr.bf16.mxu0 0
    %2666 = vmatpush2.bf16.msra.mxu0 0
    %2667 = vmatprep.subr.bf16.mxu0 0
    %2668 = vmatpush2.bf16.msra.mxu0 0
    %2669 = vmatprep.subr.bf16.mxu0 0
    %2670 = vmatpush2.bf16.msra.mxu0 0
    %2671 = vmatprep.subr.bf16.mxu0 0
    %2672 = vmatpush2.bf16.msra.mxu0 0
    %2673 = vmatprep.subr.bf16.mxu0 0
    %2674 = vmatpush2.bf16.msra.mxu0 0
    %2675 = vmatprep.mubr.bf16.mxu0 0
    %2676 = vmatmul.mubr.bf16.gmra.mxu0 %v1921
    %v2677 = vpop.f32.mrf.mxu0
    %v2678 = vadd.f32 %v2637, %v2677
    %v2679 = vpop.f32.mrf.mxu0
    %v2680 = vadd.f32 %v2639, %v2679
    %v2681 = vpop.f32.mrf.mxu0
    %v2682 = vpop.f32.mrf.mxu0
    %2683 = vdwg.mxu0
    %2684 = vst [vmem:[#allocation16] sm:$0xff] %v2596
    %2685 = vst [vmem:[#allocation16 + $0x8] sm:$0xff] %v2598
    %2686 = vst [vmem:[#allocation16 + $0x10] sm:$0xff] %v2678
    %2687 = vst [vmem:[#allocation16 + $0x18] sm:$0xff] %v2680
    // Predicated region
    $region66: #{tpu_custom_call.1} parent=1 // pred_check
      _
    $region67: #{tpu_custom_call.1} parent=1 // pred_check_branch
      %2689 = sbr.rel (0) target = $region69
    $region68: #{tpu_custom_call.1} parent=1 // pred_region
      %s2691 = ssub.s32 512, 512
      %2692 = vsyncadd [#allocation4], %s2691
      %s2694 = sshll.u32 [#allocation16], 4
      %s2695 = int_to_ptr.vmem [resolvable:$true] %s2694
      %2697 = dma.vmem_to_hbm [thread:$0]  %s2695, 512, %s8, [#allocation4]
    $region69: #{tpu_custom_call.1} parent=1 // pred_fallthru
      _
    // Predicated region
    $region70: #{tpu_custom_call.1} parent=1 // pred_check
      _
    $region71: #{tpu_custom_call.1} parent=1 // pred_check_branch
      %2699 = sbr.rel (0) target = $region73
    $region72: #{tpu_custom_call.1} parent=1 // pred_region
      %2700 = dma.done [#allocation4], 512
    $region73: #{tpu_custom_call.1} parent=1 // pred_fallthru
      _
    %2701 = vsyncpa [#allocation3], 1
    %2702 = vsyncpa [#allocation6], 1
    %2703 = vsyncpa [#allocation9], 1
    %2704 = vsyncpa [#allocation12], 1
    %2705 = vsyncpa [#allocation15], 1
    %2706 = vsyncpa [#allocation4], 1

</llo_original>
